<compile_context>
chip_gen: v5e
topology: v5e:2x2
jax: 0.10.0
libtpu: 0.0.40
codegen_flags: <defaults>
</compile_context>

<pallas_src>
import functools
import math

import jax
import jax.numpy as jnp
from jax.experimental import pallas as pl
from jax.experimental.pallas import tpu as pltpu


def _layer_norm(z, gamma, beta, eps=1e-5):
    mu = jnp.mean(z, axis=-1, keepdims=True)
    var = jnp.mean((z - mu) ** 2, axis=-1, keepdims=True)  # biased, like nn.LayerNorm
    return (z - mu) * jax.lax.rsqrt(var + eps) * gamma + beta


# -----------------------------------------------------------------------------
# Kernel 1: K / V projection, head-split once per token.
# -----------------------------------------------------------------------------
def kv_proj_kernel(x_ref, wk_ref, bk_ref, wv_ref, bv_ref, k_ref, v_ref, *, num_heads):
    ts = x_ref.shape[1]
    d = x_ref.shape[2]
    hd = d // num_heads
    x = x_ref[0]                                                     # (ts, D) bf16
    k = jnp.dot(x, wk_ref[...], preferred_element_type=jnp.float32) + bk_ref[...]
    v = jnp.dot(x, wv_ref[...], preferred_element_type=jnp.float32) + bv_ref[...]
    # head split + transpose paid once per token (not per (query-tile, kv-tile) pair)
    k_ref[0] = k.astype(k_ref.dtype).reshape(ts, num_heads, hd).transpose(1, 0, 2)
    v_ref[0] = v.astype(v_ref.dtype).reshape(ts, num_heads, hd).transpose(1, 0, 2)


# -----------------------------------------------------------------------------
# Kernel 2: flash-style attention (online softmax over K/V tiles)
#           + output proj + Add&LN + FFN + Add&LN.
# -----------------------------------------------------------------------------
def attn_ffn_kernel(
    xq_ref, k_ref, v_ref,
    wq_ref, bq_ref, wo_ref, bo_ref,
    g1_ref, be1_ref, w1_ref, b1_ref, w2_ref, b2_ref, g2_ref, be2_ref,
    o_ref,
    q_sc, m_sc, l_sc, acc_sc,
    *, num_heads,
):
    kt = pl.program_id(2)
    n_kt = pl.num_programs(2)
    tq = xq_ref.shape[1]
    d = xq_ref.shape[2]
    hd = d // num_heads

    # ---- per-query-tile init: Q projection (scale folded into Wq/bq) + softmax state
    @pl.when(kt == 0)
    def _():
        q = (jnp.dot(xq_ref[0], wq_ref[...], preferred_element_type=jnp.float32)
             + bq_ref[...])                                          # (TQ, D) f32
        q_sc[...] = q.astype(q_sc.dtype).reshape(tq, num_heads, hd).transpose(1, 0, 2)
        m_sc[...] = jnp.full(m_sc.shape, -jnp.inf, dtype=m_sc.dtype)
        l_sc[...] = jnp.zeros(l_sc.shape, dtype=l_sc.dtype)
        acc_sc[...] = jnp.zeros(acc_sc.shape, dtype=acc_sc.dtype)

    # ---- one K/V tile: online-softmax update (mask=None; attention dropout = identity)
    k = k_ref[0]                                                     # (H, TK, hd) bf16
    v = v_ref[0]                                                     # (H, TK, hd) bf16
    s = jnp.einsum("hqd,hkd->hqk", q_sc[...], k,
                   preferred_element_type=jnp.float32)               # (H, TQ, TK)
    m_prev = m_sc[...]
    m_new = jnp.maximum(m_prev, jnp.max(s, axis=-1, keepdims=True))
    alpha = jnp.exp(m_prev - m_new)
    # TODO(synk): on v6e/v7x the exp could run in bf16 (2x EUP rate); kept f32 for accuracy.
    p = jnp.exp(s - m_new)                                           # unnormalized probs
    l_sc[...] = alpha * l_sc[...] + jnp.sum(p, axis=-1, keepdims=True)
    acc_sc[...] = alpha * acc_sc[...] + jnp.einsum(
        "hqk,hkd->hqd", p.astype(jnp.bfloat16), v,
        preferred_element_type=jnp.float32)                          # (H, TQ, hd)
    m_sc[...] = m_new

    # ---- finalize: normalize AFTER the PV matmul, then Wo + LN1 + FFN + LN2 ---------
    @pl.when(kt == n_kt - 1)
    def _():
        attn = acc_sc[...] * pl.reciprocal(l_sc[...], approx=True)   # (H, TQ, hd)
        attn = attn.transpose(1, 0, 2).reshape(tq, d).astype(jnp.bfloat16)
        attn_out = (jnp.dot(attn, wo_ref[...], preferred_element_type=jnp.float32)
                    + bo_ref[...])
        xq = xq_ref[0].astype(jnp.float32)
        x1 = _layer_norm(xq + attn_out, g1_ref[...], be1_ref[...])
        h1 = (jnp.dot(x1.astype(jnp.bfloat16), w1_ref[...],
                      preferred_element_type=jnp.float32) + b1_ref[...])
        h1 = jnp.maximum(h1, 0.0)                                    # ReLU; FFN dropout = identity
        ff = (jnp.dot(h1.astype(jnp.bfloat16), w2_ref[...],
                      preferred_element_type=jnp.float32) + b2_ref[...])
        x2 = _layer_norm(x1 + ff, g2_ref[...], be2_ref[...])
        o_ref[0] = x2.astype(o_ref.dtype)


def _tpu_vmem_bytes():
    try:
        return int(pltpu.get_tpu_info().vmem_capacity_bytes)
    except Exception:
        return 128 * 1024 * 1024


def transformer_block(x, params, *, num_heads, tq=None, tk=None):
    B, S, D = x.shape
    F = params["w1"].shape[1]
    assert D % num_heads == 0
    hd = D // num_heads

    vmem_cap = _tpu_vmem_bytes()
    big_vmem = vmem_cap > 96 * 1024 * 1024          # v5e / v6e (128 MiB) vs v7x (64 MiB)
    if tq is None:
        tq = min(S, 512 if big_vmem else 256)
    if tk is None:
        tk = min(S, 512)
    assert S % tq == 0 and S % tk == 0
    n_qt, n_kt = S // tq, S // tk
    vmem_limit = int(max(32 * 1024 * 1024, vmem_cap - 16 * 1024 * 1024))

    scale = 1.0 / math.sqrt(hd)
    f32, bf16 = jnp.float32, jnp.bfloat16

    # Activations stream as bf16 (half the HBM traffic / VMEM windows); weights bf16 once.
    x_bf = x.astype(bf16)
    wq = (params["wq"].astype(f32) * scale).astype(bf16)   # fold 1/sqrt(hd) into Wq
    wk = params["wk"].astype(bf16)
    wv = params["wv"].astype(bf16)
    wo = params["wo"].astype(bf16)
    w1 = params["w1"].astype(bf16)
    w2 = params["w2"].astype(bf16)
    bq = (params["bq"].astype(f32) * scale).reshape(1, D)
    bk = params["bk"].astype(f32).reshape(1, D)
    bv = params["bv"].astype(f32).reshape(1, D)
    bo = params["bo"].astype(f32).reshape(1, D)
    b1 = params["b1"].astype(f32).reshape(1, F)
    b2 = params["b2"].astype(f32).reshape(1, D)
    g1 = params["g1"].astype(f32).reshape(1, D)
    be1 = params["be1"].astype(f32).reshape(1, D)
    g2 = params["g2"].astype(f32).reshape(1, D)
    be2 = params["be2"].astype(f32).reshape(1, D)

    def run(single_buffer_weights):
        def const2d(shape):
            # Grid-invariant operand: constant index_map (DMA'd once) + single buffer.
            if single_buffer_weights:
                return pl.BlockSpec(shape, lambda *_: (0, 0),
                                    pipeline_mode=pl.Buffered(1))
            return pl.BlockSpec(shape, lambda *_: (0, 0))

        # ----------------------- Kernel 1: K / V projection -----------------------
        ts = tk
        k_heads, v_heads = pl.pallas_call(
            functools.partial(kv_proj_kernel, num_heads=num_heads),
            out_shape=(jax.ShapeDtypeStruct((B, num_heads, S, hd), bf16),
                       jax.ShapeDtypeStruct((B, num_heads, S, hd), bf16)),
            grid_spec=pltpu.PrefetchScalarGridSpec(
                num_scalar_prefetch=0,
                grid=(B, S // ts),
                in_specs=[
                    pl.BlockSpec((1, ts, D), lambda b, s: (b, s, 0)),
                    const2d((D, D)), const2d((1, D)),        # Wk, bk
                    const2d((D, D)), const2d((1, D)),        # Wv, bv
                ],
                out_specs=[
                    pl.BlockSpec((1, num_heads, ts, hd), lambda b, s: (b, 0, s, 0)),
                    pl.BlockSpec((1, num_heads, ts, hd), lambda b, s: (b, 0, s, 0)),
                ],
            ),
            compiler_params=pltpu.CompilerParams(
                dimension_semantics=("parallel", "parallel"),
                vmem_limit_bytes=vmem_limit),
            cost_estimate=pl.CostEstimate(
                flops=4 * B * S * D * D,
                transcendentals=0,
                bytes_accessed=3 * B * S * D * 2 + 4 * D * D + 8 * D),
        )(x_bf, wk, bk, wv, bv)

        # --------------- Kernel 2: attention + Add&LN + FFN + Add&LN ---------------
        flops = B * (4 * S * D * D + 4 * S * S * D + 4 * S * D * F)
        bytes_accessed = (B * S * D * 2                     # x (bf16)
                          + 2 * n_qt * B * S * D * 2        # K/V streamed per q tile
                          + B * S * D * x.dtype.itemsize    # output
                          + 2 * (2 * D * D + 2 * D * F)     # bf16 weights (Wq, Wo, W1, W2)
                          + 4 * (8 * D + F))                # f32 bias / LN vectors
        return pl.pallas_call(
            functools.partial(attn_ffn_kernel, num_heads=num_heads),
            out_shape=jax.ShapeDtypeStruct((B, S, D), x.dtype),
            grid_spec=pltpu.PrefetchScalarGridSpec(
                num_scalar_prefetch=0,
                grid=(B, n_qt, n_kt),
                in_specs=[
                    pl.BlockSpec((1, tq, D), lambda b, q, k: (b, q, 0)),
                    pl.BlockSpec((1, num_heads, tk, hd), lambda b, q, k: (b, 0, k, 0)),
                    pl.BlockSpec((1, num_heads, tk, hd), lambda b, q, k: (b, 0, k, 0)),
                    const2d((D, D)), const2d((1, D)),        # Wq (pre-scaled), bq
                    const2d((D, D)), const2d((1, D)),        # Wo, bo
                    const2d((1, D)), const2d((1, D)),        # gamma1, beta1
                    const2d((D, F)), const2d((1, F)),        # W1, b1
                    const2d((F, D)), const2d((1, D)),        # W2, b2
                    const2d((1, D)), const2d((1, D)),        # gamma2, beta2
                ],
                out_specs=pl.BlockSpec((1, tq, D), lambda b, q, k: (b, q, 0)),
                scratch_shapes=[
                    pltpu.VMEM((num_heads, tq, hd), bf16),   # Q for this query tile
                    pltpu.VMEM((num_heads, tq, 1), f32),     # running max m
                    pltpu.VMEM((num_heads, tq, 1), f32),     # running denom l
                    pltpu.VMEM((num_heads, tq, hd), f32),    # running PV accumulator
                ],
            ),
            compiler_params=pltpu.CompilerParams(
                dimension_semantics=("parallel", "parallel", "arbitrary"),
                vmem_limit_bytes=vmem_limit),
            cost_estimate=pl.CostEstimate(
                flops=flops,
                transcendentals=B * num_heads * S * S,
                bytes_accessed=bytes_accessed),
        )(x_bf, k_heads, v_heads,
          wq, bq, wo, bo, g1, be1, w1, b1, w2, b2, g2, be2)

    try:
        return run(single_buffer_weights=True)
    except Exception:
        # Fallback for jax versions that reject pipeline_mode=pl.Buffered(1).
        return run(single_buffer_weights=False)


def transformer_block_ref(x, params, *, num_heads,
                          weight_dtype=jnp.float32, act_dtype=jnp.float32):
    """Pure-JAX reference. weight_dtype/act_dtype=bfloat16 mirror the kernel's bf16
    weights and streamed activations (all math still f32) so the comparison isolates
    kernel bugs from deliberate quantization choices."""
    B, S, D = x.shape
    hd = D // num_heads
    x = x.astype(act_dtype).astype(jnp.float32)

    def w(name):
        return params[name].astype(weight_dtype).astype(jnp.float32)

    q = x @ w("wq") + params["bq"]
    k = x @ w("wk") + params["bk"]
    v = x @ w("wv") + params["bv"]
    q = q.reshape(B, S, num_heads, hd).transpose(0, 2, 1, 3)
    k = k.reshape(B, S, num_heads, hd).transpose(0, 2, 1, 3)
    v = v.reshape(B, S, num_heads, hd).transpose(0, 2, 1, 3)
    s = jnp.einsum("bhqd,bhkd->bhqk", q, k) / math.sqrt(hd)
    p = jax.nn.softmax(s, axis=-1)
    a = jnp.einsum("bhqk,bhkd->bhqd", p, v).transpose(0, 2, 1, 3).reshape(B, S, D)
    a = a @ w("wo") + params["bo"]
    x1 = _layer_norm(x + a, params["g1"], params["be1"])
    ff = jnp.maximum(x1 @ w("w1") + params["b1"], 0.0) @ w("w2") + params["b2"]
    return _layer_norm(x1 + ff, params["g2"], params["be2"])


if __name__ == "__main__":
    B, S, D, NH, FF = 2, 8, 32, 4, 64

    keys = jax.random.split(jax.random.PRNGKey(0), 13)
    scale = 0.1
    params = {
        "wq": scale * jax.random.normal(keys[0], (D, D), jnp.float32),
        "bq": scale * jax.random.normal(keys[1], (D,), jnp.float32),
        "wk": scale * jax.random.normal(keys[2], (D, D), jnp.float32),
        "bk": scale * jax.random.normal(keys[3], (D,), jnp.float32),
        "wv": scale * jax.random.normal(keys[4], (D, D), jnp.float32),
        "bv": scale * jax.random.normal(keys[5], (D,), jnp.float32),
        "wo": scale * jax.random.normal(keys[6], (D, D), jnp.float32),
        "bo": scale * jax.random.normal(keys[7], (D,), jnp.float32),
        "g1": jnp.ones((D,), jnp.float32),
        "be1": jnp.zeros((D,), jnp.float32),
        "w1": scale * jax.random.normal(keys[8], (D, FF), jnp.float32),
        "b1": scale * jax.random.normal(keys[9], (FF,), jnp.float32),
        "w2": scale * jax.random.normal(keys[10], (FF, D), jnp.float32),
        "b2": scale * jax.random.normal(keys[11], (D,), jnp.float32),
        "g2": jnp.ones((D,), jnp.float32),
        "be2": jnp.zeros((D,), jnp.float32),
    }
    x = jax.random.normal(keys[12], (B, S, D), jnp.float32)

    out = transformer_block(x, params, num_heads=NH)
    out = jax.block_until_ready(out)
    assert out.shape == (B, S, D)

    # Compare against an f32-math reference that uses the same bf16-rounded weights and
    # bf16-streamed activations (deliberate quantization choices of the kernel).
    ref = transformer_block_ref(x, params, num_heads=NH,
                                weight_dtype=jnp.bfloat16, act_dtype=jnp.bfloat16)
    assert jnp.allclose(out, ref, atol=2e-2, rtol=2e-2), "mismatch vs reference"

    print("KERNEL_OK")
</pallas_src>

<mosaic_0001>
module attributes {stable_mosaic.version = 11 : i64} {
  func.func @kv_proj_kernel(%arg0: i32, %arg1: i32, %arg2: memref<1x8x32xbf16, #tpu.memory_space<vmem>>, %arg3: memref<32x32xbf16, #tpu.memory_space<vmem>>, %arg4: memref<1x32xf32, #tpu.memory_space<vmem>>, %arg5: memref<32x32xbf16, #tpu.memory_space<vmem>>, %arg6: memref<1x32xf32, #tpu.memory_space<vmem>>, %arg7: memref<1x4x8x8xbf16, #tpu.memory_space<vmem>>, %arg8: memref<1x4x8x8xbf16, #tpu.memory_space<vmem>>) attributes {dimension_semantics = [#tpu.dimension_semantics<parallel>, #tpu.dimension_semantics<parallel>], iteration_bounds = array<i64: 2, 1>, scalar_prefetch = 0 : i64, scratch_operands = 0 : i64, tpu.core_type = #tpu.core_type<tc>, window_params = [{transform_indices = @transform_0, window_bounds = array<i64: 1, 8, 32>}, {pipeline_mode = #tpu.pipeline_mode<synchronous>, transform_indices = @transform_1, window_bounds = array<i64: 32, 32>}, {pipeline_mode = #tpu.pipeline_mode<synchronous>, transform_indices = @transform_2, window_bounds = array<i64: 1, 32>}, {pipeline_mode = #tpu.pipeline_mode<synchronous>, transform_indices = @transform_3, window_bounds = array<i64: 32, 32>}, {pipeline_mode = #tpu.pipeline_mode<synchronous>, transform_indices = @transform_4, window_bounds = array<i64: 1, 32>}, {transform_indices = @transform_5, window_bounds = array<i64: 1, 4, 8, 8>}, {transform_indices = @transform_6, window_bounds = array<i64: 1, 4, 8, 8>}]} {
    %c0 = arith.constant 0 : index
    %c0_0 = arith.constant 0 : index
    %c0_1 = arith.constant 0 : index
    %0 = vector.load %arg2[%c0, %c0_0, %c0_1] : memref<1x8x32xbf16, #tpu.memory_space<vmem>>, vector<1x8x32xbf16>
    %1 = vector.shape_cast %0 : vector<1x8x32xbf16> to vector<8x32xbf16>
    %c0_2 = arith.constant 0 : index
    %c0_3 = arith.constant 0 : index
    %2 = vector.load %arg3[%c0_2, %c0_3] : memref<32x32xbf16, #tpu.memory_space<vmem>>, vector<32x32xbf16>
    %cst = arith.constant dense<0.000000e+00> : vector<8x32xf32>
    %3 = tpu.matmul %1, %2, %cst {dimension_numbers = #tpu.dot_dimension_numbers<[1], [0], [0], [1], [0, 0, 1, 1], [], []>} : vector<8x32xbf16>, vector<32x32xbf16>, vector<8x32xf32> -> vector<8x32xf32>
    %c0_4 = arith.constant 0 : index
    %c0_5 = arith.constant 0 : index
    %4 = vector.load %arg4[%c0_4, %c0_5] : memref<1x32xf32, #tpu.memory_space<vmem>>, vector<1x32xf32>
    %5 = vector.broadcast %4 : vector<1x32xf32> to vector<8x32xf32>
    %6 = arith.addf %3, %5 : vector<8x32xf32>
    %c0_6 = arith.constant 0 : index
    %c0_7 = arith.constant 0 : index
    %7 = vector.load %arg5[%c0_6, %c0_7] : memref<32x32xbf16, #tpu.memory_space<vmem>>, vector<32x32xbf16>
    %cst_8 = arith.constant dense<0.000000e+00> : vector<8x32xf32>
    %8 = tpu.matmul %1, %7, %cst_8 {dimension_numbers = #tpu.dot_dimension_numbers<[1], [0], [0], [1], [0, 0, 1, 1], [], []>} : vector<8x32xbf16>, vector<32x32xbf16>, vector<8x32xf32> -> vector<8x32xf32>
    %c0_9 = arith.constant 0 : index
    %c0_10 = arith.constant 0 : index
    %9 = vector.load %arg6[%c0_9, %c0_10] : memref<1x32xf32, #tpu.memory_space<vmem>>, vector<1x32xf32>
    %10 = vector.broadcast %9 : vector<1x32xf32> to vector<8x32xf32>
    %11 = arith.addf %8, %10 : vector<8x32xf32>
    %12 = arith.truncf %6 : vector<8x32xf32> to vector<8x32xbf16>
    %13 = vector.shape_cast %12 : vector<8x32xbf16> to vector<8x4x8xbf16>
    %14 = tpu.transpose %13, [1, 0, 2] : vector<8x4x8xbf16> -> vector<4x8x8xbf16>
    %c0_11 = arith.constant 0 : index
    %c0_12 = arith.constant 0 : index
    %c0_13 = arith.constant 0 : index
    %c0_14 = arith.constant 0 : index
    %15 = vector.load %arg7[%c0_11, %c0_12, %c0_13, %c0_14] : memref<1x4x8x8xbf16, #tpu.memory_space<vmem>>, vector<1x4x8x8xbf16>
    %16 = vector.shape_cast %15 : vector<1x4x8x8xbf16> to vector<4x8x8xbf16>
    %17 = vector.shape_cast %14 : vector<4x8x8xbf16> to vector<1x4x8x8xbf16>
    tpu.vector_store %arg7[%c0_11, %c0_12, %c0_13, %c0_14], %17 {strides = array<i32>} : memref<1x4x8x8xbf16, #tpu.memory_space<vmem>>, vector<1x4x8x8xbf16>,
    %18 = arith.truncf %11 : vector<8x32xf32> to vector<8x32xbf16>
    %19 = vector.shape_cast %18 : vector<8x32xbf16> to vector<8x4x8xbf16>
    %20 = tpu.transpose %19, [1, 0, 2] : vector<8x4x8xbf16> -> vector<4x8x8xbf16>
    %c0_15 = arith.constant 0 : index
    %c0_16 = arith.constant 0 : index
    %c0_17 = arith.constant 0 : index
    %c0_18 = arith.constant 0 : index
    %21 = vector.load %arg8[%c0_15, %c0_16, %c0_17, %c0_18] : memref<1x4x8x8xbf16, #tpu.memory_space<vmem>>, vector<1x4x8x8xbf16>
    %22 = vector.shape_cast %21 : vector<1x4x8x8xbf16> to vector<4x8x8xbf16>
    %23 = vector.shape_cast %20 : vector<4x8x8xbf16> to vector<1x4x8x8xbf16>
    tpu.vector_store %arg8[%c0_15, %c0_16, %c0_17, %c0_18], %23 {strides = array<i32>} : memref<1x4x8x8xbf16, #tpu.memory_space<vmem>>, vector<1x4x8x8xbf16>,
    return
  }
  func.func @transform_0(%arg0: i32, %arg1: i32) -> (i32, i32, i32) {
    %c0_i32 = arith.constant 0 : i32
    %c0_i32_0 = arith.constant 0 : i32
    return %arg0, %arg1, %c0_i32 : i32, i32, i32
  }
  func.func @transform_1(%arg0: i32, %arg1: i32) -> (i32, i32) {
    %c0_i32 = arith.constant 0 : i32
    %c0_i32_0 = arith.constant 0 : i32
    %c0_i32_1 = arith.constant 0 : i32
    return %c0_i32, %c0_i32_0 : i32, i32
  }
  func.func @transform_2(%arg0: i32, %arg1: i32) -> (i32, i32) {
    %c0_i32 = arith.constant 0 : i32
    %c0_i32_0 = arith.constant 0 : i32
    %c0_i32_1 = arith.constant 0 : i32
    return %c0_i32, %c0_i32_0 : i32, i32
  }
  func.func @transform_3(%arg0: i32, %arg1: i32) -> (i32, i32) {
    %c0_i32 = arith.constant 0 : i32
    %c0_i32_0 = arith.constant 0 : i32
    %c0_i32_1 = arith.constant 0 : i32
    return %c0_i32, %c0_i32_0 : i32, i32
  }
  func.func @transform_4(%arg0: i32, %arg1: i32) -> (i32, i32) {
    %c0_i32 = arith.constant 0 : i32
    %c0_i32_0 = arith.constant 0 : i32
    %c0_i32_1 = arith.constant 0 : i32
    return %c0_i32, %c0_i32_0 : i32, i32
  }
  func.func @transform_5(%arg0: i32, %arg1: i32) -> (i32, i32, i32, i32) {
    %c0_i32 = arith.constant 0 : i32
    %c0_i32_0 = arith.constant 0 : i32
    %c0_i32_1 = arith.constant 0 : i32
    return %arg0, %c0_i32, %arg1, %c0_i32_0 : i32, i32, i32, i32
  }
  func.func @transform_6(%arg0: i32, %arg1: i32) -> (i32, i32, i32, i32) {
    %c0_i32 = arith.constant 0 : i32
    %c0_i32_0 = arith.constant 0 : i32
    %c0_i32_1 = arith.constant 0 : i32
    return %arg0, %c0_i32, %arg1, %c0_i32_0 : i32, i32, i32, i32
  }
}

module attributes {stable_mosaic.version = 11 : i64} {
  func.func @kv_proj_kernel(%arg0: i32, %arg1: i32, %arg2: memref<1x8x32xbf16, #tpu.memory_space<vmem>>, %arg3: memref<32x32xbf16, #tpu.memory_space<vmem>>, %arg4: memref<1x32xf32, #tpu.memory_space<vmem>>, %arg5: memref<32x32xbf16, #tpu.memory_space<vmem>>, %arg6: memref<1x32xf32, #tpu.memory_space<vmem>>, %arg7: memref<1x4x8x8xbf16, #tpu.memory_space<vmem>>, %arg8: memref<1x4x8x8xbf16, #tpu.memory_space<vmem>>) attributes {dimension_semantics = [#tpu.dimension_semantics<parallel>, #tpu.dimension_semantics<parallel>], iteration_bounds = array<i64: 2, 1>, scalar_prefetch = 0 : i64, scratch_operands = 0 : i64, tpu.core_type = #tpu.core_type<tc>, window_params = [{transform_indices = @transform_0, window_bounds = array<i64: 1, 8, 32>}, {pipeline_mode = #tpu.pipeline_mode<synchronous>, transform_indices = @transform_1, window_bounds = array<i64: 32, 32>}, {pipeline_mode = #tpu.pipeline_mode<synchronous>, transform_indices = @transform_2, window_bounds = array<i64: 1, 32>}, {pipeline_mode = #tpu.pipeline_mode<synchronous>, transform_indices = @transform_3, window_bounds = array<i64: 32, 32>}, {pipeline_mode = #tpu.pipeline_mode<synchronous>, transform_indices = @transform_4, window_bounds = array<i64: 1, 32>}, {transform_indices = @transform_5, window_bounds = array<i64: 1, 4, 8, 8>}, {transform_indices = @transform_6, window_bounds = array<i64: 1, 4, 8, 8>}]} {
    %c0 = arith.constant 0 : index
    %c0_0 = arith.constant 0 : index
    %c0_1 = arith.constant 0 : index
    %0 = vector.load %arg2[%c0, %c0_0, %c0_1] : memref<1x8x32xbf16, #tpu.memory_space<vmem>>, vector<1x8x32xbf16>
    %1 = vector.shape_cast %0 : vector<1x8x32xbf16> to vector<8x32xbf16>
    %c0_2 = arith.constant 0 : index
    %c0_3 = arith.constant 0 : index
    %2 = vector.load %arg3[%c0_2, %c0_3] : memref<32x32xbf16, #tpu.memory_space<vmem>>, vector<32x32xbf16>
    %cst = arith.constant dense<0.000000e+00> : vector<8x32xf32>
    %3 = tpu.matmul %1, %2, %cst {dimension_numbers = #tpu.dot_dimension_numbers<[1], [0], [0], [1], [0, 0, 1, 1], [], []>} : vector<8x32xbf16>, vector<32x32xbf16>, vector<8x32xf32> -> vector<8x32xf32>
    %c0_4 = arith.constant 0 : index
    %c0_5 = arith.constant 0 : index
    %4 = vector.load %arg4[%c0_4, %c0_5] : memref<1x32xf32, #tpu.memory_space<vmem>>, vector<1x32xf32>
    %5 = vector.broadcast %4 : vector<1x32xf32> to vector<8x32xf32>
    %6 = arith.addf %3, %5 : vector<8x32xf32>
    %c0_6 = arith.constant 0 : index
    %c0_7 = arith.constant 0 : index
    %7 = vector.load %arg5[%c0_6, %c0_7] : memref<32x32xbf16, #tpu.memory_space<vmem>>, vector<32x32xbf16>
    %cst_8 = arith.constant dense<0.000000e+00> : vector<8x32xf32>
    %8 = tpu.matmul %1, %7, %cst_8 {dimension_numbers = #tpu.dot_dimension_numbers<[1], [0], [0], [1], [0, 0, 1, 1], [], []>} : vector<8x32xbf16>, vector<32x32xbf16>, vector<8x32xf32> -> vector<8x32xf32>
    %c0_9 = arith.constant 0 : index
    %c0_10 = arith.constant 0 : index
    %9 = vector.load %arg6[%c0_9, %c0_10] : memref<1x32xf32, #tpu.memory_space<vmem>>, vector<1x32xf32>
    %10 = vector.broadcast %9 : vector<1x32xf32> to vector<8x32xf32>
    %11 = arith.addf %8, %10 : vector<8x32xf32>
    %12 = arith.truncf %6 : vector<8x32xf32> to vector<8x32xbf16>
    %13 = vector.shape_cast %12 : vector<8x32xbf16> to vector<8x4x8xbf16>
    %14 = tpu.transpose %13, [1, 0, 2] : vector<8x4x8xbf16> -> vector<4x8x8xbf16>
    %c0_11 = arith.constant 0 : index
    %c0_12 = arith.constant 0 : index
    %c0_13 = arith.constant 0 : index
    %c0_14 = arith.constant 0 : index
    %15 = vector.load %arg7[%c0_11, %c0_12, %c0_13, %c0_14] : memref<1x4x8x8xbf16, #tpu.memory_space<vmem>>, vector<1x4x8x8xbf16>
    %16 = vector.shape_cast %15 : vector<1x4x8x8xbf16> to vector<4x8x8xbf16>
    %17 = vector.shape_cast %14 : vector<4x8x8xbf16> to vector<1x4x8x8xbf16>
    tpu.vector_store %arg7[%c0_11, %c0_12, %c0_13, %c0_14], %17 {strides = array<i32>} : memref<1x4x8x8xbf16, #tpu.memory_space<vmem>>, vector<1x4x8x8xbf16>,
    %18 = arith.truncf %11 : vector<8x32xf32> to vector<8x32xbf16>
    %19 = vector.shape_cast %18 : vector<8x32xbf16> to vector<8x4x8xbf16>
    %20 = tpu.transpose %19, [1, 0, 2] : vector<8x4x8xbf16> -> vector<4x8x8xbf16>
    %c0_15 = arith.constant 0 : index
    %c0_16 = arith.constant 0 : index
    %c0_17 = arith.constant 0 : index
    %c0_18 = arith.constant 0 : index
    %21 = vector.load %arg8[%c0_15, %c0_16, %c0_17, %c0_18] : memref<1x4x8x8xbf16, #tpu.memory_space<vmem>>, vector<1x4x8x8xbf16>
    %22 = vector.shape_cast %21 : vector<1x4x8x8xbf16> to vector<4x8x8xbf16>
    %23 = vector.shape_cast %20 : vector<4x8x8xbf16> to vector<1x4x8x8xbf16>
    tpu.vector_store %arg8[%c0_15, %c0_16, %c0_17, %c0_18], %23 {strides = array<i32>} : memref<1x4x8x8xbf16, #tpu.memory_space<vmem>>, vector<1x4x8x8xbf16>,
    return
  }
  func.func @transform_0(%arg0: i32, %arg1: i32) -> (i32, i32, i32) {
    %c0_i32 = arith.constant 0 : i32
    %c0_i32_0 = arith.constant 0 : i32
    return %arg0, %arg1, %c0_i32 : i32, i32, i32
  }
  func.func @transform_1(%arg0: i32, %arg1: i32) -> (i32, i32) {
    %c0_i32 = arith.constant 0 : i32
    %c0_i32_0 = arith.constant 0 : i32
    %c0_i32_1 = arith.constant 0 : i32
    return %c0_i32, %c0_i32_0 : i32, i32
  }
  func.func @transform_2(%arg0: i32, %arg1: i32) -> (i32, i32) {
    %c0_i32 = arith.constant 0 : i32
    %c0_i32_0 = arith.constant 0 : i32
    %c0_i32_1 = arith.constant 0 : i32
    return %c0_i32, %c0_i32_0 : i32, i32
  }
  func.func @transform_3(%arg0: i32, %arg1: i32) -> (i32, i32) {
    %c0_i32 = arith.constant 0 : i32
    %c0_i32_0 = arith.constant 0 : i32
    %c0_i32_1 = arith.constant 0 : i32
    return %c0_i32, %c0_i32_0 : i32, i32
  }
  func.func @transform_4(%arg0: i32, %arg1: i32) -> (i32, i32) {
    %c0_i32 = arith.constant 0 : i32
    %c0_i32_0 = arith.constant 0 : i32
    %c0_i32_1 = arith.constant 0 : i32
    return %c0_i32, %c0_i32_0 : i32, i32
  }
  func.func @transform_5(%arg0: i32, %arg1: i32) -> (i32, i32, i32, i32) {
    %c0_i32 = arith.constant 0 : i32
    %c0_i32_0 = arith.constant 0 : i32
    %c0_i32_1 = arith.constant 0 : i32
    return %arg0, %c0_i32, %arg1, %c0_i32_0 : i32, i32, i32, i32
  }
  func.func @transform_6(%arg0: i32, %arg1: i32) -> (i32, i32, i32, i32) {
    %c0_i32 = arith.constant 0 : i32
    %c0_i32_0 = arith.constant 0 : i32
    %c0_i32_1 = arith.constant 0 : i32
    return %arg0, %c0_i32, %arg1, %c0_i32_0 : i32, i32, i32, i32
  }
}

</mosaic_0001>

<llo_original>
// kernel: tpu_custom_call.1
$region0: #{tpu_custom_call.1}
  #allocation0 [shape = 'u32[]', space=smem, size = 0x4, offset = 0x4, fixed_abs, tag = 'smem constant byte address 0x4 - core index']
  #allocation1 [shape = 'u32[72,128]{1,0:T(1,128)}', space=vmem, size = 0x9000, scoped, tag = 'internal scratch']
  %s0 = inlined_call_operand.hbm [shape: bf16[2,8,32], index: 0, kind: input, shape index: {}]
  %s1 = inlined_call_operand.hbm [shape: bf16[32,32], index: 1, kind: input, shape index: {}]
  %s2 = inlined_call_operand.vmem [shape: f32[1,32], index: 2, kind: input, shape index: {}]
  %s3 = inlined_call_operand.hbm [shape: bf16[32,32], index: 3, kind: input, shape index: {}]
  %s4 = inlined_call_operand.vmem [shape: f32[1,32], index: 4, kind: input, shape index: {}]
  %s5 = inlined_call_operand.hbm [shape: bf16[2,4,8,8], index: 5, kind: output, shape index: {0}]
  %s6 = inlined_call_operand.hbm [shape: bf16[2,4,8,8], index: 6, kind: output, shape index: {1}]
  %7 = xla_tuple %s5, %s6
  %s8 = sld [smem:[#allocation0]]
  $region73: #{tpu_custom_call.1} parent=0
    _
  %s10 = ssub.s32 1, %s8
  %s11 = scalar_select 0, %s10, %s8
  $region1: #{tpu_custom_call.1} parent=0
    #allocation2 [shape = 'u8[4096]{0}', space=vmem, size = 0x1000, scoped, tag = 'input window, operand 0']
    #allocation3 [shape = 's32[2]{0}', space=sflag, size = 0x8, scoped, tag = 'scoped memory for tpu_custom_call.1']
    #allocation4 [shape = 's32[2]{0}', space=sflag, size = 0x8, scoped, tag = 'scoped memory for tpu_custom_call.1']
    #allocation5 [shape = 'u8[8192]{0}', space=vmem, size = 0x2000, scoped, tag = 'input window, operand 1, single buffered']
    #allocation6 [shape = 's32[1]{0}', space=sflag, size = 0x4, scoped, tag = 'scoped memory for tpu_custom_call.1']
    #allocation7 [shape = 'u8[8192]{0}', space=vmem, size = 0x2000, scoped, tag = 'input window, operand 3, single buffered']
    #allocation8 [shape = 'u8[16384]{0}', space=vmem, size = 0x4000, scoped, tag = 'output window, operand 0']
    #allocation9 [shape = 'u8[16384]{0}', space=vmem, size = 0x4000, scoped, tag = 'output window, operand 1']
    #allocation10 [shape = 's32[2]{0}', space=sflag, size = 0x8, scoped, tag = 'scoped memory for tpu_custom_call.1']
    %12 = vsyncpa [#allocation3], 0
    %s13 = scalar_lea.sflag [#allocation3], 1
    %14 = vsyncpa %s13, 0
    %15 = vsyncpa [#allocation6], 0
    %16 = vsyncpa [#allocation4], 0
    %s17 = scalar_lea.sflag [#allocation4], 1
    %18 = vsyncpa %s17, 0
    %19 = vsyncpa [#allocation10], 0
    %s20 = scalar_lea.sflag [#allocation10], 1
    %21 = vsyncpa %s20, 0
    loop: start=0, step=1, limit=4
    $region2: #{tpu_custom_call.1} parent=1 // loop_pre_header
      _
    $region3: #{tpu_custom_call.1} parent=1 // loop_header
      %s23 = sphi 0, %s27
      %p24 = scmp.ge.s32.totalorder %s23, 4
      %s30 = sphi 0, %s42
      %s31 = sphi 0, %s38
      %s32 = sphi 0, %s30
      %s33 = sphi 0, %s31
      %s34 = sphi 0, %s32
      %s35 = sphi 0, %s33
      %s47 = sphi 0, %s49
      %s50 = sphi 0, %s47
      %s51 = sphi 0, %s50
      %s67 = sphi 0, %s51
      %s71 = sphi 0, %s71
      %s73 = sphi 0, %s71
      %s74 = sphi 0, %s73
      %s88 = sphi 0, %s74
      %s92 = sphi 0, %s92
      %s94 = sphi 0, %s92
      %s95 = sphi 0, %s94
      %s109 = sphi 0, %s95
      %s113 = sphi 0, %s113
      %s115 = sphi 0, %s113
      %s116 = sphi 0, %s115
      %s130 = sphi 0, %s116
      %s134 = sphi 0, %s134
      %s136 = sphi 0, %s134
      %s137 = sphi 0, %s136
      %s151 = sphi 0, %s137
      %s159 = sphi 0, %s161
      %s162 = sphi 0, %s159
      %s163 = sphi 0, %s162
      %s179 = sphi 0, %s163
      %s187 = sphi 0, %s189
      %s190 = sphi 0, %s187
      %s191 = sphi 0, %s190
      %s207 = sphi 0, %s191
    $region4: #{tpu_custom_call.1} parent=1 // loop_header_branch
      %26 = sbr.rel (%p24) target = $region8
    $region5: #{tpu_custom_call.1} parent=1 // loop_body
      %s28 = ssub.s32 %s23, 1
      %s29 = ssub.s32 %s23, 2
      %s36 = sadd.s32 1, %s31
      %p37 = scmp.ge.s32.totalorder %s36, 1
      %s38 = scalar_select %p37, 0, %s36
      %s39 = sadd.s32 1, %s30
      %s40 = scalar_select %p37, %s39, %s30
      %p41 = scmp.ge.s32.totalorder %s40, 2
      %s42 = scalar_select %p41, 0, %s40
      %s43 = ssub.s32 %s30, %s42
      %s44 = ssub.s32 %s31, %s38
      %s45 = sor.u32 %s43, %s44
      %p46 = scmp.eq.s32.totalorder %s45, 0
      %s48 = sadd.s32 %s47, 1
      %s49 = scalar_select %p46, %s47, %s48
      %p52 = pneg %p46
      %p53 = scmp.eq.s32.totalorder %s23, 1
      %p54 = por %p52, %p53
      %p55 = scmp.ne.s32.totalorder %s47, %s50
      %p56 = scmp.eq.s32.totalorder %s23, 0
      %p57 = por %p55, %p56
      %p58 = scmp.ne.s32.totalorder %s47, %s50
      %p59 = scmp.eq.s32.totalorder %s28, 1
      %p60 = por %p58, %p59
      %p61 = scmp.ne.s32.totalorder %s50, %s51
      %p62 = scmp.eq.s32.totalorder %s28, 0
      %p63 = por %p61, %p62
      %p64 = scmp.ne.s32.totalorder %s50, %s51
      %p65 = scmp.eq.s32.totalorder %s29, 1
      %p66 = por %p64, %p65
      %p68 = scmp.ne.s32.totalorder %s51, %s67
      %p69 = scmp.eq.s32.totalorder %s29, 0
      %p70 = por %p68, %p69
      %s72 = sadd.s32 %s71, 1
      %p75 = scmp.eq.s32.totalorder %s23, 1
      %p76 = scmp.ne.s32.totalorder %s71, %s73
      %p77 = scmp.eq.s32.totalorder %s23, 0
      %p78 = por %p76, %p77
      %p79 = scmp.ne.s32.totalorder %s71, %s73
      %p80 = scmp.eq.s32.totalorder %s28, 1
      %p81 = por %p79, %p80
      %p82 = scmp.ne.s32.totalorder %s73, %s74
      %p83 = scmp.eq.s32.totalorder %s28, 0
      %p84 = por %p82, %p83
      %p85 = scmp.ne.s32.totalorder %s73, %s74
      %p86 = scmp.eq.s32.totalorder %s29, 1
      %p87 = por %p85, %p86
      %p89 = scmp.ne.s32.totalorder %s74, %s88
      %p90 = scmp.eq.s32.totalorder %s29, 0
      %p91 = por %p89, %p90
      %s93 = sadd.s32 %s92, 1
      %p96 = scmp.eq.s32.totalorder %s23, 1
      %p97 = scmp.ne.s32.totalorder %s92, %s94
      %p98 = scmp.eq.s32.totalorder %s23, 0
      %p99 = por %p97, %p98
      %p100 = scmp.ne.s32.totalorder %s92, %s94
      %p101 = scmp.eq.s32.totalorder %s28, 1
      %p102 = por %p100, %p101
      %p103 = scmp.ne.s32.totalorder %s94, %s95
      %p104 = scmp.eq.s32.totalorder %s28, 0
      %p105 = por %p103, %p104
      %p106 = scmp.ne.s32.totalorder %s94, %s95
      %p107 = scmp.eq.s32.totalorder %s29, 1
      %p108 = por %p106, %p107
      %p110 = scmp.ne.s32.totalorder %s95, %s109
      %p111 = scmp.eq.s32.totalorder %s29, 0
      %p112 = por %p110, %p111
      %s114 = sadd.s32 %s113, 1
      %p117 = scmp.eq.s32.totalorder %s23, 1
      %p118 = scmp.ne.s32.totalorder %s113, %s115
      %p119 = scmp.eq.s32.totalorder %s23, 0
      %p120 = por %p118, %p119
      %p121 = scmp.ne.s32.totalorder %s113, %s115
      %p122 = scmp.eq.s32.totalorder %s28, 1
      %p123 = por %p121, %p122
      %p124 = scmp.ne.s32.totalorder %s115, %s116
      %p125 = scmp.eq.s32.totalorder %s28, 0
      %p126 = por %p124, %p125
      %p127 = scmp.ne.s32.totalorder %s115, %s116
      %p128 = scmp.eq.s32.totalorder %s29, 1
      %p129 = por %p127, %p128
      %p131 = scmp.ne.s32.totalorder %s116, %s130
      %p132 = scmp.eq.s32.totalorder %s29, 0
      %p133 = por %p131, %p132
      %s135 = sadd.s32 %s134, 1
      %p138 = scmp.eq.s32.totalorder %s23, 1
      %p139 = scmp.ne.s32.totalorder %s134, %s136
      %p140 = scmp.eq.s32.totalorder %s23, 0
      %p141 = por %p139, %p140
      %p142 = scmp.ne.s32.totalorder %s134, %s136
      %p143 = scmp.eq.s32.totalorder %s28, 1
      %p144 = por %p142, %p143
      %p145 = scmp.ne.s32.totalorder %s136, %s137
      %p146 = scmp.eq.s32.totalorder %s28, 0
      %p147 = por %p145, %p146
      %p148 = scmp.ne.s32.totalorder %s136, %s137
      %p149 = scmp.eq.s32.totalorder %s29, 1
      %p150 = por %p148, %p149
      %p152 = scmp.ne.s32.totalorder %s137, %s151
      %p153 = scmp.eq.s32.totalorder %s29, 0
      %p154 = por %p152, %p153
      %s155 = ssub.s32 %s30, %s42
      %s156 = ssub.s32 %s31, %s38
      %s157 = sor.u32 %s155, %s156
      %p158 = scmp.eq.s32.totalorder %s157, 0
      %s160 = sadd.s32 %s159, 1
      %s161 = scalar_select %p158, %s159, %s160
      %p164 = pneg %p158
      %p165 = scmp.eq.s32.totalorder %s23, 1
      %p166 = por %p164, %p165
      %p167 = scmp.ne.s32.totalorder %s159, %s162
      %p168 = scmp.eq.s32.totalorder %s23, 0
      %p169 = por %p167, %p168
      %p170 = scmp.ne.s32.totalorder %s159, %s162
      %p171 = scmp.eq.s32.totalorder %s28, 1
      %p172 = por %p170, %p171
      %p173 = scmp.ne.s32.totalorder %s162, %s163
      %p174 = scmp.eq.s32.totalorder %s28, 0
      %p175 = por %p173, %p174
      %p176 = scmp.ne.s32.totalorder %s162, %s163
      %p177 = scmp.eq.s32.totalorder %s29, 1
      %p178 = por %p176, %p177
      %p180 = scmp.ne.s32.totalorder %s163, %s179
      %p181 = scmp.eq.s32.totalorder %s29, 0
      %p182 = por %p180, %p181
      %s183 = ssub.s32 %s30, %s42
      %s184 = ssub.s32 %s31, %s38
      %s185 = sor.u32 %s183, %s184
      %p186 = scmp.eq.s32.totalorder %s185, 0
      %s188 = sadd.s32 %s187, 1
      %s189 = scalar_select %p186, %s187, %s188
      %p192 = pneg %p186
      %p193 = scmp.eq.s32.totalorder %s23, 1
      %p194 = por %p192, %p193
      %p195 = scmp.ne.s32.totalorder %s187, %s190
      %p196 = scmp.eq.s32.totalorder %s23, 0
      %p197 = por %p195, %p196
      %p198 = scmp.ne.s32.totalorder %s187, %s190
      %p199 = scmp.eq.s32.totalorder %s28, 1
      %p200 = por %p198, %p199
      %p201 = scmp.ne.s32.totalorder %s190, %s191
      %p202 = scmp.eq.s32.totalorder %s28, 0
      %p203 = por %p201, %p202
      %p204 = scmp.ne.s32.totalorder %s190, %s191
      %p205 = scmp.eq.s32.totalorder %s29, 1
      %p206 = por %p204, %p205
      %p208 = scmp.ne.s32.totalorder %s191, %s207
      %p209 = scmp.eq.s32.totalorder %s29, 0
      %p210 = por %p208, %p209
      %p211 = scmp.le.s32.totalorder 1, %s23
      %p212 = scmp.lt.s32.totalorder %s23, 3
      %p213 = pnand %p211, %p212
      %p214 = pneg %p213
      // Predicated region
      $region9: #{tpu_custom_call.1} parent=5 // pred_check
        _
      $region10: #{tpu_custom_call.1} parent=5 // pred_check_branch
        %216 = sbr.rel (%p213) target = $region12
      $region11: #{tpu_custom_call.1} parent=5 // pred_region
        %s217 = ssub.s32 %s23, 1
        // Predicated region
        $region13: #{tpu_custom_call.1} parent=11 // pred_check
          %p218 = pneg %p84
        $region14: #{tpu_custom_call.1} parent=11 // pred_check_branch
          %220 = sbr.rel (%p218) target = $region16
        $region15: #{tpu_custom_call.1} parent=11 // pred_region
          %222 = vsyncadd [#allocation6], 0
          %s223 = sshll.u32 %s1, 4
          %s224 = int_to_ptr.hbm [resolvable:$true] %s223
          %s225 = sshll.u32 [#allocation5], 4
          %s226 = int_to_ptr.vmem [resolvable:$true] %s225
          %231 = dma.hbm_to_vmem [thread:$0]  %s224, 256, %s226, [#allocation6], 64, 64, 4
        $region16: #{tpu_custom_call.1} parent=11 // pred_fallthru
          _
        // Predicated region
        $region17: #{tpu_custom_call.1} parent=11 // pred_check
          %p232 = pneg %p105
        $region18: #{tpu_custom_call.1} parent=11 // pred_check_branch
          %234 = sbr.rel (%p232) target = $region20
        $region19: #{tpu_custom_call.1} parent=11 // pred_region
          _
        $region20: #{tpu_custom_call.1} parent=11 // pred_fallthru
          _
        // Predicated region
        $region21: #{tpu_custom_call.1} parent=11 // pred_check
          %p235 = pneg %p126
        $region22: #{tpu_custom_call.1} parent=11 // pred_check_branch
          %237 = sbr.rel (%p235) target = $region24
        $region23: #{tpu_custom_call.1} parent=11 // pred_region
          %239 = vsyncadd [#allocation6], 0
          %s240 = sshll.u32 %s3, 4
          %s241 = int_to_ptr.hbm [resolvable:$true] %s240
          %s242 = sshll.u32 [#allocation7], 4
          %s243 = int_to_ptr.vmem [resolvable:$true] %s242
          %248 = dma.hbm_to_vmem [thread:$0]  %s241, 256, %s243, [#allocation6], 64, 64, 4
        $region24: #{tpu_custom_call.1} parent=11 // pred_fallthru
          _
        // Predicated region
        $region25: #{tpu_custom_call.1} parent=11 // pred_check
          %p249 = pneg %p147
        $region26: #{tpu_custom_call.1} parent=11 // pred_check_branch
          %251 = sbr.rel (%p249) target = $region28
        $region27: #{tpu_custom_call.1} parent=11 // pred_region
          _
        $region28: #{tpu_custom_call.1} parent=11 // pred_fallthru
          _
      $region12: #{tpu_custom_call.1} parent=5 // pred_fallthru
        _
      %p252 = scmp.lt.s32.totalorder %s23, 2
      // Predicated region
      $region29: #{tpu_custom_call.1} parent=5 // pred_check
        %p253 = pneg %p252
      $region30: #{tpu_custom_call.1} parent=5 // pred_check_branch
        %255 = sbr.rel (%p253) target = $region32
      $region31: #{tpu_custom_call.1} parent=5 // pred_region
        // Predicated region
        $region33: #{tpu_custom_call.1} parent=31 // pred_check
          %p256 = pneg %p57
        $region34: #{tpu_custom_call.1} parent=31 // pred_check_branch
          %258 = sbr.rel (%p256) target = $region36
        $region35: #{tpu_custom_call.1} parent=31 // pred_region
          %s259 = sand.u32 %s47, 1
          %s260 = scalar_lea.sflag [#allocation3], %s259
          %s261 = sand.u32 %s47, 1
          %s262 = smul.addr %s261, 4
          %s263 = scalar_lea.vmem [#allocation2], %s262
          %265 = vsyncadd %s260, 0
          %s266 = sadd.s32 %s31, %s30
          %s267 = smul.addr %s266, 4
          %s268 = scalar_lea.hbm %s0, %s267
          %s270 = sshll.u32 %s268, 4
          %s271 = int_to_ptr.hbm [resolvable:$true] %s270
          %s272 = sshll.u32 %s263, 4
          %s273 = int_to_ptr.vmem [resolvable:$true] %s272
          %275 = dma.hbm_to_vmem [thread:$0]  %s271, 64, %s273, %s260
        $region36: #{tpu_custom_call.1} parent=31 // pred_fallthru
          _
      $region32: #{tpu_custom_call.1} parent=5 // pred_fallthru
        _
      %p276 = scmp.le.s32.totalorder 1, %s23
      %p277 = scmp.lt.s32.totalorder %s23, 3
      %p278 = pnand %p276, %p277
      %p279 = pneg %p278
      // Predicated region
      $region37: #{tpu_custom_call.1} parent=5 // pred_check
        _
      $region38: #{tpu_custom_call.1} parent=5 // pred_check_branch
        %281 = sbr.rel (%p278) target = $region40
      $region39: #{tpu_custom_call.1} parent=5 // pred_region
        %s282 = ssub.s32 %s23, 1
        %s283 = sand.u32 %s50, 1
        %s284 = scalar_lea.sflag [#allocation3], %s283
        %s285 = sand.u32 %s50, 1
        %s286 = smul.addr %s285, 4
        %s287 = scalar_lea.vmem [#allocation2], %s286
        // Predicated region
        $region41: #{tpu_custom_call.1} parent=39 // pred_check
          %p288 = pneg %p63
        $region42: #{tpu_custom_call.1} parent=39 // pred_check_branch
          %290 = sbr.rel (%p288) target = $region44
        $region43: #{tpu_custom_call.1} parent=39 // pred_region
          %292 = dma.done %s284, 64
        $region44: #{tpu_custom_call.1} parent=39 // pred_fallthru
          _
        // Predicated region
        $region45: #{tpu_custom_call.1} parent=39 // pred_check
          %p293 = pneg %p84
        $region46: #{tpu_custom_call.1} parent=39 // pred_check_branch
          %295 = sbr.rel (%p293) target = $region48
        $region47: #{tpu_custom_call.1} parent=39 // pred_region
          %297 = dma.done [#allocation6], 256
        $region48: #{tpu_custom_call.1} parent=39 // pred_fallthru
          _
        // Predicated region
        $region49: #{tpu_custom_call.1} parent=39 // pred_check
          %p298 = pneg %p126
        $region50: #{tpu_custom_call.1} parent=39 // pred_check_branch
          %300 = sbr.rel (%p298) target = $region52
        $region51: #{tpu_custom_call.1} parent=39 // pred_region
          %302 = dma.done [#allocation6], 256
        $region52: #{tpu_custom_call.1} parent=39 // pred_fallthru
          _
        %s303 = sand.u32 %s50, 1
        %s304 = scalar_lea.sflag [#allocation3], %s303
        %s305 = sand.u32 %s50, 1
        %s306 = smul.addr %s305, 4
        %s307 = scalar_lea.vmem [#allocation2], %s306
        %p308 = pneg %p63
        %p309 = pneg %p60
        %p310 = pneg %p84
        %p311 = pneg %p81
        %p312 = pneg %p105
        %p313 = pneg %p102
        %p314 = pneg %p126
        %p315 = pneg %p123
        %p316 = pneg %p147
        %p317 = pneg %p144
        %p318 = pneg %p175
        %p319 = pneg %p172
        %s320 = sand.u32 %s162, 1
        %s321 = scalar_lea.sflag [#allocation4], %s320
        %s322 = sand.u32 %s162, 1
        %s323 = smul.addr %s322, 16
        %s324 = scalar_lea.vmem [#allocation8], %s323
        %p325 = pneg %p203
        %p326 = pneg %p200
        %s327 = sand.u32 %s190, 1
        %s328 = scalar_lea.sflag [#allocation10], %s327
        %s329 = sand.u32 %s190, 1
        %s330 = smul.addr %s329, 16
        %s331 = scalar_lea.vmem [#allocation9], %s330
        %v333 = vld [vmem:[%s287] sm:$0xf]
        %v334 = vld [vmem:[#allocation5] sm:$0xf]
        %v335 = vld [vmem:[#allocation5 + $0x4] sm:$0xf]
        %v336 = vld [vmem:[#allocation5 + $0x8] sm:$0xf]
        %v337 = vld [vmem:[#allocation5 + $0xc] sm:$0xf]
        %v338 = vld [vmem:[%s2] sm:$0x1]
        %v340 = vperm.slane %v338, 0
        %v346 = vunpack.c.l.b16 %v334
        %v347 = vunpack.c.l.b16 %v335
        %v348 = vunpack.c.l.b16 %v336
        %v349 = vunpack.c.l.b16 %v337
        %v350 = vpack.c.b16 %v347, %v346
        %v351 = vpack.c.b16 %v349, %v348
        %vm354 = vcmask 261120
        %v356 = vsel %vm354, %v333, 0
        %358 = vmatpush.bf16.msra.mxu0 0
        %359 = vmatpush.bf16.msra.mxu0 0
        %360 = vmatpush.bf16.msra.mxu0 0
        %361 = vmatpush.bf16.msra.mxu0 0
        %362 = vmatpush.bf16.msra.mxu0 0
        %363 = vmatpush.bf16.msra.mxu0 0
        %364 = vmatpush.bf16.msra.mxu0 %v351
        %365 = vmatpush.bf16.msra.mxu0 %v350
        %366 = vmatmul.bf16.gmra.mxu0 %v356
        %v367 = vpop.f32.mrf.mxu0
        %v368 = vadd.f32 %v340, %v367
        %v369 = vpop.f32.mrf.mxu0
        %370 = vdwg.mxu0
        %v371 = vld [vmem:[#allocation7] sm:$0xf]
        %v372 = vld [vmem:[#allocation7 + $0x4] sm:$0xf]
        %v373 = vld [vmem:[#allocation7 + $0x8] sm:$0xf]
        %v374 = vld [vmem:[#allocation7 + $0xc] sm:$0xf]
        %v375 = vld [vmem:[%s4] sm:$0x1]
        %v377 = vperm.slane %v375, 0
        %v383 = vunpack.c.l.b16 %v371
        %v384 = vunpack.c.l.b16 %v372
        %v385 = vunpack.c.l.b16 %v373
        %v386 = vunpack.c.l.b16 %v374
        %v387 = vpack.c.b16 %v384, %v383
        %v388 = vpack.c.b16 %v386, %v385
        %391 = vmatpush.bf16.msra.mxu0 0
        %392 = vmatpush.bf16.msra.mxu0 0
        %393 = vmatpush.bf16.msra.mxu0 0
        %394 = vmatpush.bf16.msra.mxu0 0
        %395 = vmatpush.bf16.msra.mxu0 0
        %396 = vmatpush.bf16.msra.mxu0 0
        %397 = vmatpush.bf16.msra.mxu0 %v388
        %398 = vmatpush.bf16.msra.mxu0 %v387
        %399 = vmatmul.bf16.gmra.mxu0 %v356
        %v400 = vpop.f32.mrf.mxu0
        %v401 = vadd.f32 %v377, %v400
        %v402 = vpop.f32.mrf.mxu0
        %403 = vdwg.mxu0
        %v404 = vpack.c.bf16 %v368, %v368
        %406 = vrot.lane.b32.xlu0 %v404, 120
        %v407 = vpop.permute.xlu0 %406
        %408 = vrot.lane.b32.xlu0 %v404, 112
        %v409 = vpop.permute.xlu0 %408
        %410 = vrot.lane.b32.xlu0 %v404, 104
        %v411 = vpop.permute.xlu0 %410
        %v414 = vpack.i.b16 %v407, %v404
        %v415 = vshrl.u32 %v404, 16
        %v416 = vshrl.u32 %v407, 16
        %v417 = vpack.i.b16 %v416, %v415
        %v420 = vpack.i.b16 %v411, %v409
        %v421 = vshrl.u32 %v409, 16
        %v422 = vshrl.u32 %v411, 16
        %v423 = vpack.i.b16 %v422, %v421
        %v426 = vunpack.c.l.s4 1983009808
        %v427 = vunpack.c.0.s8 %v426
        %v428 = vperm.slane %v414, %v427
        %v431 = vunpack.c.l.s4 1983009808
        %v432 = vunpack.c.0.s8 %v431
        %v433 = vperm.slane %v420, %v432
        %v434 = vrot.slane %v433, 4
        %vm435 = vcmask 1047556
        %v436 = vsel %vm435, %v434, %v428
        %v437 = vrot.slane %v428, 4
        %v438 = vsel %vm435, %v433, %v437
        %v440 = vunpack.c.l.s4 1934713408
        %v441 = vunpack.c.0.s8 %v440
        %v442 = vperm.slane %v436, %v441
        %v444 = vunpack.c.l.s4 1934713408
        %v445 = vunpack.c.0.s8 %v444
        %v446 = vperm.slane %v438, %v445
        %v447 = vrot.slane %v442, 4
        %v448 = vsel %vm435, 0, %v447
        %v449 = vrot.slane %v446, 4
        %v450 = vsel %vm435, 0, %v449
        %v453 = vunpack.c.l.s4 1983009808
        %v454 = vunpack.c.0.s8 %v453
        %v455 = vperm.slane %v417, %v454
        %v458 = vunpack.c.l.s4 1983009808
        %v459 = vunpack.c.0.s8 %v458
        %v460 = vperm.slane %v423, %v459
        %v461 = vrot.slane %v460, 4
        %v462 = vsel %vm435, %v461, %v455
        %v463 = vrot.slane %v455, 4
        %v464 = vsel %vm435, %v460, %v463
        %v466 = vunpack.c.l.s4 1934713408
        %v467 = vunpack.c.0.s8 %v466
        %v468 = vperm.slane %v462, %v467
        %v470 = vunpack.c.l.s4 1934713408
        %v471 = vunpack.c.0.s8 %v470
        %v472 = vperm.slane %v464, %v471
        %v473 = vrot.slane %v468, 4
        %v474 = vsel %vm435, 0, %v473
        %v475 = vrot.slane %v472, 4
        %v476 = vsel %vm435, 0, %v475
        %v477 = vsel %vm435, %v449, %v442
        %v479 = vunpack.c.l.s4 1983009808
        %v480 = vunpack.c.0.s8 %v479
        %v481 = vperm.slane %v477, %v480
        %v482 = vrot.slane %v450, 4
        %v483 = vsel %vm435, %v482, %v448
        %v485 = vunpack.c.l.s4 1983009808
        %v486 = vunpack.c.0.s8 %v485
        %v487 = vperm.slane %v483, %v486
        %v488 = vrot.slane %v487, 4
        %v489 = vsel %vm435, %v488, %v481
        %v491 = vunpack.c.l.s4 1934713408
        %v492 = vunpack.c.0.s8 %v491
        %v493 = vperm.slane %v489, %v492
        %v494 = vrot.slane %v493, 4
        %v495 = vsel %vm435, 0, %v494
        %v496 = vsel %vm435, %v475, %v468
        %v498 = vunpack.c.l.s4 1983009808
        %v499 = vunpack.c.0.s8 %v498
        %v500 = vperm.slane %v496, %v499
        %v501 = vrot.slane %v476, 4
        %v502 = vsel %vm435, %v501, %v474
        %v504 = vunpack.c.l.s4 1983009808
        %v505 = vunpack.c.0.s8 %v504
        %v506 = vperm.slane %v502, %v505
        %v507 = vrot.slane %v506, 4
        %v508 = vsel %vm435, %v507, %v500
        %v510 = vunpack.c.l.s4 1934713408
        %v511 = vunpack.c.0.s8 %v510
        %v512 = vperm.slane %v508, %v511
        %v513 = vrot.slane %v512, 4
        %v514 = vsel %vm435, 0, %v513
        %v517 = vpack.i.b16 %v512, %v493
        %v519 = vshrl.u32 %v493, 16
        %v520 = vshrl.u32 %v512, 16
        %v521 = vpack.i.b16 %v520, %v519
        %v525 = vpack.i.b16 %v514, %v495
        %v527 = vshrl.u32 %v495, 16
        %v528 = vshrl.u32 %v514, 16
        %v529 = vpack.i.b16 %v528, %v527
        %vm531 = vcmask 60416
        %532 = vst.msk [vmem:[%s324] sm:$0xf] %vm531, %v517
        %533 = vst.msk [vmem:[%s324 + $0x4] sm:$0xf] %vm531, %v521
        %534 = vst.msk [vmem:[%s324 + $0x8] sm:$0xf] %vm531, %v525
        %535 = vst.msk [vmem:[%s324 + $0xc] sm:$0xf] %vm531, %v529
        %v536 = vpack.c.bf16 %v401, %v401
        %538 = vrot.lane.b32.xlu0 %v536, 120
        %v539 = vpop.permute.xlu0 %538
        %540 = vrot.lane.b32.xlu0 %v536, 112
        %v541 = vpop.permute.xlu0 %540
        %542 = vrot.lane.b32.xlu0 %v536, 104
        %v543 = vpop.permute.xlu0 %542
        %v546 = vpack.i.b16 %v539, %v536
        %v547 = vshrl.u32 %v536, 16
        %v548 = vshrl.u32 %v539, 16
        %v549 = vpack.i.b16 %v548, %v547
        %v552 = vpack.i.b16 %v543, %v541
        %v553 = vshrl.u32 %v541, 16
        %v554 = vshrl.u32 %v543, 16
        %v555 = vpack.i.b16 %v554, %v553
        %v558 = vunpack.c.l.s4 1983009808
        %v559 = vunpack.c.0.s8 %v558
        %v560 = vperm.slane %v546, %v559
        %v563 = vunpack.c.l.s4 1983009808
        %v564 = vunpack.c.0.s8 %v563
        %v565 = vperm.slane %v552, %v564
        %v566 = vrot.slane %v565, 4
        %v567 = vsel %vm435, %v566, %v560
        %v568 = vrot.slane %v560, 4
        %v569 = vsel %vm435, %v565, %v568
        %v571 = vunpack.c.l.s4 1934713408
        %v572 = vunpack.c.0.s8 %v571
        %v573 = vperm.slane %v567, %v572
        %v575 = vunpack.c.l.s4 1934713408
        %v576 = vunpack.c.0.s8 %v575
        %v577 = vperm.slane %v569, %v576
        %v578 = vrot.slane %v573, 4
        %v579 = vsel %vm435, 0, %v578
        %v580 = vrot.slane %v577, 4
        %v581 = vsel %vm435, 0, %v580
        %v584 = vunpack.c.l.s4 1983009808
        %v585 = vunpack.c.0.s8 %v584
        %v586 = vperm.slane %v549, %v585
        %v589 = vunpack.c.l.s4 1983009808
        %v590 = vunpack.c.0.s8 %v589
        %v591 = vperm.slane %v555, %v590
        %v592 = vrot.slane %v591, 4
        %v593 = vsel %vm435, %v592, %v586
        %v594 = vrot.slane %v586, 4
        %v595 = vsel %vm435, %v591, %v594
        %v597 = vunpack.c.l.s4 1934713408
        %v598 = vunpack.c.0.s8 %v597
        %v599 = vperm.slane %v593, %v598
        %v601 = vunpack.c.l.s4 1934713408
        %v602 = vunpack.c.0.s8 %v601
        %v603 = vperm.slane %v595, %v602
        %v604 = vrot.slane %v599, 4
        %v605 = vsel %vm435, 0, %v604
        %v606 = vrot.slane %v603, 4
        %v607 = vsel %vm435, 0, %v606
        %v608 = vsel %vm435, %v580, %v573
        %v610 = vunpack.c.l.s4 1983009808
        %v611 = vunpack.c.0.s8 %v610
        %v612 = vperm.slane %v608, %v611
        %v613 = vrot.slane %v581, 4
        %v614 = vsel %vm435, %v613, %v579
        %v616 = vunpack.c.l.s4 1983009808
        %v617 = vunpack.c.0.s8 %v616
        %v618 = vperm.slane %v614, %v617
        %v619 = vrot.slane %v618, 4
        %v620 = vsel %vm435, %v619, %v612
        %v622 = vunpack.c.l.s4 1934713408
        %v623 = vunpack.c.0.s8 %v622
        %v624 = vperm.slane %v620, %v623
        %v625 = vrot.slane %v624, 4
        %v626 = vsel %vm435, 0, %v625
        %v627 = vsel %vm435, %v606, %v599
        %v629 = vunpack.c.l.s4 1983009808
        %v630 = vunpack.c.0.s8 %v629
        %v631 = vperm.slane %v627, %v630
        %v632 = vrot.slane %v607, 4
        %v633 = vsel %vm435, %v632, %v605
        %v635 = vunpack.c.l.s4 1983009808
        %v636 = vunpack.c.0.s8 %v635
        %v637 = vperm.slane %v633, %v636
        %v638 = vrot.slane %v637, 4
        %v639 = vsel %vm435, %v638, %v631
        %v641 = vunpack.c.l.s4 1934713408
        %v642 = vunpack.c.0.s8 %v641
        %v643 = vperm.slane %v639, %v642
        %v644 = vrot.slane %v643, 4
        %v645 = vsel %vm435, 0, %v644
        %v648 = vpack.i.b16 %v643, %v624
        %v650 = vshrl.u32 %v624, 16
        %v651 = vshrl.u32 %v643, 16
        %v652 = vpack.i.b16 %v651, %v650
        %v656 = vpack.i.b16 %v645, %v626
        %v658 = vshrl.u32 %v626, 16
        %v659 = vshrl.u32 %v645, 16
        %v660 = vpack.i.b16 %v659, %v658
        %662 = vst.msk [vmem:[%s331] sm:$0xf] %vm531, %v648
        %663 = vst.msk [vmem:[%s331 + $0x4] sm:$0xf] %vm531, %v652
        %664 = vst.msk [vmem:[%s331 + $0x8] sm:$0xf] %vm531, %v656
        %665 = vst.msk [vmem:[%s331 + $0xc] sm:$0xf] %vm531, %v660
        %s666 = sand.u32 %s162, 1
        %s667 = scalar_lea.sflag [#allocation4], %s666
        %s668 = sand.u32 %s162, 1
        %s669 = smul.addr %s668, 16
        %s670 = scalar_lea.vmem [#allocation8], %s669
        %s671 = sand.u32 %s190, 1
        %s672 = scalar_lea.sflag [#allocation10], %s671
        %s673 = sand.u32 %s190, 1
        %s674 = smul.addr %s673, 16
        %s675 = scalar_lea.vmem [#allocation9], %s674
        // Predicated region
        $region53: #{tpu_custom_call.1} parent=39 // pred_check
          %p676 = pneg %p172
        $region54: #{tpu_custom_call.1} parent=39 // pred_check_branch
          %678 = sbr.rel (%p676) target = $region56
        $region55: #{tpu_custom_call.1} parent=39 // pred_region
          %680 = vsyncadd %s667, 0
          %s681 = smul.addr %s32, 4
          %s682 = sadd.s32 %s33, %s681
          %s683 = smul.addr %s682, 4
          %s684 = scalar_lea.hbm %s5, %s683
          %s685 = sshll.u32 %s670, 4
          %s686 = int_to_ptr.vmem [resolvable:$true] %s685
          %s687 = sshll.u32 %s684, 4
          %s688 = int_to_ptr.hbm [resolvable:$true] %s687
          %693 = dma.vmem_to_hbm [thread:$0]  %s686, 256, %s688, %s667, 64, 64, 4
        $region56: #{tpu_custom_call.1} parent=39 // pred_fallthru
          _
        // Predicated region
        $region57: #{tpu_custom_call.1} parent=39 // pred_check
          %p694 = pneg %p200
        $region58: #{tpu_custom_call.1} parent=39 // pred_check_branch
          %696 = sbr.rel (%p694) target = $region60
        $region59: #{tpu_custom_call.1} parent=39 // pred_region
          %698 = vsyncadd %s672, 0
          %s699 = smul.addr %s32, 4
          %s700 = sadd.s32 %s33, %s699
          %s701 = smul.addr %s700, 4
          %s702 = scalar_lea.hbm %s6, %s701
          %s703 = sshll.u32 %s675, 4
          %s704 = int_to_ptr.vmem [resolvable:$true] %s703
          %s705 = sshll.u32 %s702, 4
          %s706 = int_to_ptr.hbm [resolvable:$true] %s705
          %711 = dma.vmem_to_hbm [thread:$0]  %s704, 256, %s706, %s672, 64, 64, 4
        $region60: #{tpu_custom_call.1} parent=39 // pred_fallthru
          _
      $region40: #{tpu_custom_call.1} parent=5 // pred_fallthru
        _
      %p712 = scmp.le.s32.totalorder 2, %s23
      // Predicated region
      $region61: #{tpu_custom_call.1} parent=5 // pred_check
        %p713 = pneg %p712
      $region62: #{tpu_custom_call.1} parent=5 // pred_check_branch
        %715 = sbr.rel (%p713) target = $region64
      $region63: #{tpu_custom_call.1} parent=5 // pred_region
        %s716 = ssub.s32 %s23, 2
        // Predicated region
        $region65: #{tpu_custom_call.1} parent=63 // pred_check
          %p717 = pneg %p178
        $region66: #{tpu_custom_call.1} parent=63 // pred_check_branch
          %719 = sbr.rel (%p717) target = $region68
        $region67: #{tpu_custom_call.1} parent=63 // pred_region
          %s720 = sand.u32 %s163, 1
          %s721 = scalar_lea.sflag [#allocation4], %s720
          %s722 = sand.u32 %s163, 1
          %s723 = smul.addr %s722, 16
          %s724 = scalar_lea.vmem [#allocation8], %s723
          %726 = dma.done %s721, 256
        $region68: #{tpu_custom_call.1} parent=63 // pred_fallthru
          _
        // Predicated region
        $region69: #{tpu_custom_call.1} parent=63 // pred_check
          %p727 = pneg %p206
        $region70: #{tpu_custom_call.1} parent=63 // pred_check_branch
          %729 = sbr.rel (%p727) target = $region72
        $region71: #{tpu_custom_call.1} parent=63 // pred_region
          %s730 = sand.u32 %s191, 1
          %s731 = scalar_lea.sflag [#allocation10], %s730
          %s732 = sand.u32 %s191, 1
          %s733 = smul.addr %s732, 16
          %s734 = scalar_lea.vmem [#allocation9], %s733
          %736 = dma.done %s731, 256
        $region72: #{tpu_custom_call.1} parent=63 // pred_fallthru
          _
      $region64: #{tpu_custom_call.1} parent=5 // pred_fallthru
        _
    $region6: #{tpu_custom_call.1} parent=1 // loop_footer
      %s27 = sadd.s32 1, %s23
    $region7: #{tpu_custom_call.1} parent=1 // loop_footer_branch
      %22 = sbr.rel target = $region3
    $region8: #{tpu_custom_call.1} parent=1 // loop_exit
      _
    %737 = vsyncpa [#allocation3], 1
    %s738 = scalar_lea.sflag [#allocation3], 1
    %739 = vsyncpa %s738, 1
    %740 = vsyncpa [#allocation6], 1
    %741 = vsyncpa [#allocation4], 1
    %s742 = scalar_lea.sflag [#allocation4], 1
    %743 = vsyncpa %s742, 1
    %744 = vsyncpa [#allocation10], 1
    %s745 = scalar_lea.sflag [#allocation10], 1
    %746 = vsyncpa %s745, 1

// kernel: tpu_custom_call.1
$region0: #{tpu_custom_call.1}
  #allocation0 [shape = 'u32[]', space=smem, size = 0x4, offset = 0x4, fixed_abs, tag = 'smem constant byte address 0x4 - core index']
  #allocation1 [shape = 'u32[72,128]{1,0:T(1,128)}', space=vmem, size = 0x9000, scoped, tag = 'internal scratch']
  %s0 = inlined_call_operand.hbm [shape: bf16[2,8,32], index: 0, kind: input, shape index: {}]
  %s1 = inlined_call_operand.hbm [shape: bf16[32,32], index: 1, kind: input, shape index: {}]
  %s2 = inlined_call_operand.vmem [shape: f32[1,32], index: 2, kind: input, shape index: {}]
  %s3 = inlined_call_operand.hbm [shape: bf16[32,32], index: 3, kind: input, shape index: {}]
  %s4 = inlined_call_operand.vmem [shape: f32[1,32], index: 4, kind: input, shape index: {}]
  %s5 = inlined_call_operand.hbm [shape: bf16[2,4,8,8], index: 5, kind: output, shape index: {0}]
  %s6 = inlined_call_operand.hbm [shape: bf16[2,4,8,8], index: 6, kind: output, shape index: {1}]
  %7 = xla_tuple %s5, %s6
  %s8 = sld [smem:[#allocation0]]
  $region73: #{tpu_custom_call.1} parent=0
    _
  %s10 = ssub.s32 1, %s8
  %s11 = scalar_select 0, %s10, %s8
  $region1: #{tpu_custom_call.1} parent=0
    #allocation2 [shape = 'u8[4096]{0}', space=vmem, size = 0x1000, scoped, tag = 'input window, operand 0']
    #allocation3 [shape = 's32[2]{0}', space=sflag, size = 0x8, scoped, tag = 'scoped memory for tpu_custom_call.1']
    #allocation4 [shape = 's32[2]{0}', space=sflag, size = 0x8, scoped, tag = 'scoped memory for tpu_custom_call.1']
    #allocation5 [shape = 'u8[8192]{0}', space=vmem, size = 0x2000, scoped, tag = 'input window, operand 1, single buffered']
    #allocation6 [shape = 's32[1]{0}', space=sflag, size = 0x4, scoped, tag = 'scoped memory for tpu_custom_call.1']
    #allocation7 [shape = 'u8[8192]{0}', space=vmem, size = 0x2000, scoped, tag = 'input window, operand 3, single buffered']
    #allocation8 [shape = 'u8[16384]{0}', space=vmem, size = 0x4000, scoped, tag = 'output window, operand 0']
    #allocation9 [shape = 'u8[16384]{0}', space=vmem, size = 0x4000, scoped, tag = 'output window, operand 1']
    #allocation10 [shape = 's32[2]{0}', space=sflag, size = 0x8, scoped, tag = 'scoped memory for tpu_custom_call.1']
    %12 = vsyncpa [#allocation3], 0
    %s13 = scalar_lea.sflag [#allocation3], 1
    %14 = vsyncpa %s13, 0
    %15 = vsyncpa [#allocation6], 0
    %16 = vsyncpa [#allocation4], 0
    %s17 = scalar_lea.sflag [#allocation4], 1
    %18 = vsyncpa %s17, 0
    %19 = vsyncpa [#allocation10], 0
    %s20 = scalar_lea.sflag [#allocation10], 1
    %21 = vsyncpa %s20, 0
    loop: start=0, step=1, limit=4
    $region2: #{tpu_custom_call.1} parent=1 // loop_pre_header
      _
    $region3: #{tpu_custom_call.1} parent=1 // loop_header
      %s23 = sphi 0, %s27
      %p24 = scmp.ge.s32.totalorder %s23, 4
      %s30 = sphi 0, %s42
      %s31 = sphi 0, %s38
      %s32 = sphi 0, %s30
      %s33 = sphi 0, %s31
      %s34 = sphi 0, %s32
      %s35 = sphi 0, %s33
      %s47 = sphi 0, %s49
      %s50 = sphi 0, %s47
      %s51 = sphi 0, %s50
      %s67 = sphi 0, %s51
      %s71 = sphi 0, %s71
      %s73 = sphi 0, %s71
      %s74 = sphi 0, %s73
      %s88 = sphi 0, %s74
      %s92 = sphi 0, %s92
      %s94 = sphi 0, %s92
      %s95 = sphi 0, %s94
      %s109 = sphi 0, %s95
      %s113 = sphi 0, %s113
      %s115 = sphi 0, %s113
      %s116 = sphi 0, %s115
      %s130 = sphi 0, %s116
      %s134 = sphi 0, %s134
      %s136 = sphi 0, %s134
      %s137 = sphi 0, %s136
      %s151 = sphi 0, %s137
      %s159 = sphi 0, %s161
      %s162 = sphi 0, %s159
      %s163 = sphi 0, %s162
      %s179 = sphi 0, %s163
      %s187 = sphi 0, %s189
      %s190 = sphi 0, %s187
      %s191 = sphi 0, %s190
      %s207 = sphi 0, %s191
    $region4: #{tpu_custom_call.1} parent=1 // loop_header_branch
      %26 = sbr.rel (%p24) target = $region8
    $region5: #{tpu_custom_call.1} parent=1 // loop_body
      %s28 = ssub.s32 %s23, 1
      %s29 = ssub.s32 %s23, 2
      %s36 = sadd.s32 1, %s31
      %p37 = scmp.ge.s32.totalorder %s36, 1
      %s38 = scalar_select %p37, 0, %s36
      %s39 = sadd.s32 1, %s30
      %s40 = scalar_select %p37, %s39, %s30
      %p41 = scmp.ge.s32.totalorder %s40, 2
      %s42 = scalar_select %p41, 0, %s40
      %s43 = ssub.s32 %s30, %s42
      %s44 = ssub.s32 %s31, %s38
      %s45 = sor.u32 %s43, %s44
      %p46 = scmp.eq.s32.totalorder %s45, 0
      %s48 = sadd.s32 %s47, 1
      %s49 = scalar_select %p46, %s47, %s48
      %p52 = pneg %p46
      %p53 = scmp.eq.s32.totalorder %s23, 1
      %p54 = por %p52, %p53
      %p55 = scmp.ne.s32.totalorder %s47, %s50
      %p56 = scmp.eq.s32.totalorder %s23, 0
      %p57 = por %p55, %p56
      %p58 = scmp.ne.s32.totalorder %s47, %s50
      %p59 = scmp.eq.s32.totalorder %s28, 1
      %p60 = por %p58, %p59
      %p61 = scmp.ne.s32.totalorder %s50, %s51
      %p62 = scmp.eq.s32.totalorder %s28, 0
      %p63 = por %p61, %p62
      %p64 = scmp.ne.s32.totalorder %s50, %s51
      %p65 = scmp.eq.s32.totalorder %s29, 1
      %p66 = por %p64, %p65
      %p68 = scmp.ne.s32.totalorder %s51, %s67
      %p69 = scmp.eq.s32.totalorder %s29, 0
      %p70 = por %p68, %p69
      %s72 = sadd.s32 %s71, 1
      %p75 = scmp.eq.s32.totalorder %s23, 1
      %p76 = scmp.ne.s32.totalorder %s71, %s73
      %p77 = scmp.eq.s32.totalorder %s23, 0
      %p78 = por %p76, %p77
      %p79 = scmp.ne.s32.totalorder %s71, %s73
      %p80 = scmp.eq.s32.totalorder %s28, 1
      %p81 = por %p79, %p80
      %p82 = scmp.ne.s32.totalorder %s73, %s74
      %p83 = scmp.eq.s32.totalorder %s28, 0
      %p84 = por %p82, %p83
      %p85 = scmp.ne.s32.totalorder %s73, %s74
      %p86 = scmp.eq.s32.totalorder %s29, 1
      %p87 = por %p85, %p86
      %p89 = scmp.ne.s32.totalorder %s74, %s88
      %p90 = scmp.eq.s32.totalorder %s29, 0
      %p91 = por %p89, %p90
      %s93 = sadd.s32 %s92, 1
      %p96 = scmp.eq.s32.totalorder %s23, 1
      %p97 = scmp.ne.s32.totalorder %s92, %s94
      %p98 = scmp.eq.s32.totalorder %s23, 0
      %p99 = por %p97, %p98
      %p100 = scmp.ne.s32.totalorder %s92, %s94
      %p101 = scmp.eq.s32.totalorder %s28, 1
      %p102 = por %p100, %p101
      %p103 = scmp.ne.s32.totalorder %s94, %s95
      %p104 = scmp.eq.s32.totalorder %s28, 0
      %p105 = por %p103, %p104
      %p106 = scmp.ne.s32.totalorder %s94, %s95
      %p107 = scmp.eq.s32.totalorder %s29, 1
      %p108 = por %p106, %p107
      %p110 = scmp.ne.s32.totalorder %s95, %s109
      %p111 = scmp.eq.s32.totalorder %s29, 0
      %p112 = por %p110, %p111
      %s114 = sadd.s32 %s113, 1
      %p117 = scmp.eq.s32.totalorder %s23, 1
      %p118 = scmp.ne.s32.totalorder %s113, %s115
      %p119 = scmp.eq.s32.totalorder %s23, 0
      %p120 = por %p118, %p119
      %p121 = scmp.ne.s32.totalorder %s113, %s115
      %p122 = scmp.eq.s32.totalorder %s28, 1
      %p123 = por %p121, %p122
      %p124 = scmp.ne.s32.totalorder %s115, %s116
      %p125 = scmp.eq.s32.totalorder %s28, 0
      %p126 = por %p124, %p125
      %p127 = scmp.ne.s32.totalorder %s115, %s116
      %p128 = scmp.eq.s32.totalorder %s29, 1
      %p129 = por %p127, %p128
      %p131 = scmp.ne.s32.totalorder %s116, %s130
      %p132 = scmp.eq.s32.totalorder %s29, 0
      %p133 = por %p131, %p132
      %s135 = sadd.s32 %s134, 1
      %p138 = scmp.eq.s32.totalorder %s23, 1
      %p139 = scmp.ne.s32.totalorder %s134, %s136
      %p140 = scmp.eq.s32.totalorder %s23, 0
      %p141 = por %p139, %p140
      %p142 = scmp.ne.s32.totalorder %s134, %s136
      %p143 = scmp.eq.s32.totalorder %s28, 1
      %p144 = por %p142, %p143
      %p145 = scmp.ne.s32.totalorder %s136, %s137
      %p146 = scmp.eq.s32.totalorder %s28, 0
      %p147 = por %p145, %p146
      %p148 = scmp.ne.s32.totalorder %s136, %s137
      %p149 = scmp.eq.s32.totalorder %s29, 1
      %p150 = por %p148, %p149
      %p152 = scmp.ne.s32.totalorder %s137, %s151
      %p153 = scmp.eq.s32.totalorder %s29, 0
      %p154 = por %p152, %p153
      %s155 = ssub.s32 %s30, %s42
      %s156 = ssub.s32 %s31, %s38
      %s157 = sor.u32 %s155, %s156
      %p158 = scmp.eq.s32.totalorder %s157, 0
      %s160 = sadd.s32 %s159, 1
      %s161 = scalar_select %p158, %s159, %s160
      %p164 = pneg %p158
      %p165 = scmp.eq.s32.totalorder %s23, 1
      %p166 = por %p164, %p165
      %p167 = scmp.ne.s32.totalorder %s159, %s162
      %p168 = scmp.eq.s32.totalorder %s23, 0
      %p169 = por %p167, %p168
      %p170 = scmp.ne.s32.totalorder %s159, %s162
      %p171 = scmp.eq.s32.totalorder %s28, 1
      %p172 = por %p170, %p171
      %p173 = scmp.ne.s32.totalorder %s162, %s163
      %p174 = scmp.eq.s32.totalorder %s28, 0
      %p175 = por %p173, %p174
      %p176 = scmp.ne.s32.totalorder %s162, %s163
      %p177 = scmp.eq.s32.totalorder %s29, 1
      %p178 = por %p176, %p177
      %p180 = scmp.ne.s32.totalorder %s163, %s179
      %p181 = scmp.eq.s32.totalorder %s29, 0
      %p182 = por %p180, %p181
      %s183 = ssub.s32 %s30, %s42
      %s184 = ssub.s32 %s31, %s38
      %s185 = sor.u32 %s183, %s184
      %p186 = scmp.eq.s32.totalorder %s185, 0
      %s188 = sadd.s32 %s187, 1
      %s189 = scalar_select %p186, %s187, %s188
      %p192 = pneg %p186
      %p193 = scmp.eq.s32.totalorder %s23, 1
      %p194 = por %p192, %p193
      %p195 = scmp.ne.s32.totalorder %s187, %s190
      %p196 = scmp.eq.s32.totalorder %s23, 0
      %p197 = por %p195, %p196
      %p198 = scmp.ne.s32.totalorder %s187, %s190
      %p199 = scmp.eq.s32.totalorder %s28, 1
      %p200 = por %p198, %p199
      %p201 = scmp.ne.s32.totalorder %s190, %s191
      %p202 = scmp.eq.s32.totalorder %s28, 0
      %p203 = por %p201, %p202
      %p204 = scmp.ne.s32.totalorder %s190, %s191
      %p205 = scmp.eq.s32.totalorder %s29, 1
      %p206 = por %p204, %p205
      %p208 = scmp.ne.s32.totalorder %s191, %s207
      %p209 = scmp.eq.s32.totalorder %s29, 0
      %p210 = por %p208, %p209
      %p211 = scmp.le.s32.totalorder 1, %s23
      %p212 = scmp.lt.s32.totalorder %s23, 3
      %p213 = pnand %p211, %p212
      %p214 = pneg %p213
      // Predicated region
      $region9: #{tpu_custom_call.1} parent=5 // pred_check
        _
      $region10: #{tpu_custom_call.1} parent=5 // pred_check_branch
        %216 = sbr.rel (%p213) target = $region12
      $region11: #{tpu_custom_call.1} parent=5 // pred_region
        %s217 = ssub.s32 %s23, 1
        // Predicated region
        $region13: #{tpu_custom_call.1} parent=11 // pred_check
          %p218 = pneg %p84
        $region14: #{tpu_custom_call.1} parent=11 // pred_check_branch
          %220 = sbr.rel (%p218) target = $region16
        $region15: #{tpu_custom_call.1} parent=11 // pred_region
          %222 = vsyncadd [#allocation6], 0
          %s223 = sshll.u32 %s1, 4
          %s224 = int_to_ptr.hbm [resolvable:$true] %s223
          %s225 = sshll.u32 [#allocation5], 4
          %s226 = int_to_ptr.vmem [resolvable:$true] %s225
          %231 = dma.hbm_to_vmem [thread:$0]  %s224, 256, %s226, [#allocation6], 64, 64, 4
        $region16: #{tpu_custom_call.1} parent=11 // pred_fallthru
          _
        // Predicated region
        $region17: #{tpu_custom_call.1} parent=11 // pred_check
          %p232 = pneg %p105
        $region18: #{tpu_custom_call.1} parent=11 // pred_check_branch
          %234 = sbr.rel (%p232) target = $region20
        $region19: #{tpu_custom_call.1} parent=11 // pred_region
          _
        $region20: #{tpu_custom_call.1} parent=11 // pred_fallthru
          _
        // Predicated region
        $region21: #{tpu_custom_call.1} parent=11 // pred_check
          %p235 = pneg %p126
        $region22: #{tpu_custom_call.1} parent=11 // pred_check_branch
          %237 = sbr.rel (%p235) target = $region24
        $region23: #{tpu_custom_call.1} parent=11 // pred_region
          %239 = vsyncadd [#allocation6], 0
          %s240 = sshll.u32 %s3, 4
          %s241 = int_to_ptr.hbm [resolvable:$true] %s240
          %s242 = sshll.u32 [#allocation7], 4
          %s243 = int_to_ptr.vmem [resolvable:$true] %s242
          %248 = dma.hbm_to_vmem [thread:$0]  %s241, 256, %s243, [#allocation6], 64, 64, 4
        $region24: #{tpu_custom_call.1} parent=11 // pred_fallthru
          _
        // Predicated region
        $region25: #{tpu_custom_call.1} parent=11 // pred_check
          %p249 = pneg %p147
        $region26: #{tpu_custom_call.1} parent=11 // pred_check_branch
          %251 = sbr.rel (%p249) target = $region28
        $region27: #{tpu_custom_call.1} parent=11 // pred_region
          _
        $region28: #{tpu_custom_call.1} parent=11 // pred_fallthru
          _
      $region12: #{tpu_custom_call.1} parent=5 // pred_fallthru
        _
      %p252 = scmp.lt.s32.totalorder %s23, 2
      // Predicated region
      $region29: #{tpu_custom_call.1} parent=5 // pred_check
        %p253 = pneg %p252
      $region30: #{tpu_custom_call.1} parent=5 // pred_check_branch
        %255 = sbr.rel (%p253) target = $region32
      $region31: #{tpu_custom_call.1} parent=5 // pred_region
        // Predicated region
        $region33: #{tpu_custom_call.1} parent=31 // pred_check
          %p256 = pneg %p57
        $region34: #{tpu_custom_call.1} parent=31 // pred_check_branch
          %258 = sbr.rel (%p256) target = $region36
        $region35: #{tpu_custom_call.1} parent=31 // pred_region
          %s259 = sand.u32 %s47, 1
          %s260 = scalar_lea.sflag [#allocation3], %s259
          %s261 = sand.u32 %s47, 1
          %s262 = smul.addr %s261, 4
          %s263 = scalar_lea.vmem [#allocation2], %s262
          %265 = vsyncadd %s260, 0
          %s266 = sadd.s32 %s31, %s30
          %s267 = smul.addr %s266, 4
          %s268 = scalar_lea.hbm %s0, %s267
          %s270 = sshll.u32 %s268, 4
          %s271 = int_to_ptr.hbm [resolvable:$true] %s270
          %s272 = sshll.u32 %s263, 4
          %s273 = int_to_ptr.vmem [resolvable:$true] %s272
          %275 = dma.hbm_to_vmem [thread:$0]  %s271, 64, %s273, %s260
        $region36: #{tpu_custom_call.1} parent=31 // pred_fallthru
          _
      $region32: #{tpu_custom_call.1} parent=5 // pred_fallthru
        _
      %p276 = scmp.le.s32.totalorder 1, %s23
      %p277 = scmp.lt.s32.totalorder %s23, 3
      %p278 = pnand %p276, %p277
      %p279 = pneg %p278
      // Predicated region
      $region37: #{tpu_custom_call.1} parent=5 // pred_check
        _
      $region38: #{tpu_custom_call.1} parent=5 // pred_check_branch
        %281 = sbr.rel (%p278) target = $region40
      $region39: #{tpu_custom_call.1} parent=5 // pred_region
        %s282 = ssub.s32 %s23, 1
        %s283 = sand.u32 %s50, 1
        %s284 = scalar_lea.sflag [#allocation3], %s283
        %s285 = sand.u32 %s50, 1
        %s286 = smul.addr %s285, 4
        %s287 = scalar_lea.vmem [#allocation2], %s286
        // Predicated region
        $region41: #{tpu_custom_call.1} parent=39 // pred_check
          %p288 = pneg %p63
        $region42: #{tpu_custom_call.1} parent=39 // pred_check_branch
          %290 = sbr.rel (%p288) target = $region44
        $region43: #{tpu_custom_call.1} parent=39 // pred_region
          %292 = dma.done %s284, 64
        $region44: #{tpu_custom_call.1} parent=39 // pred_fallthru
          _
        // Predicated region
        $region45: #{tpu_custom_call.1} parent=39 // pred_check
          %p293 = pneg %p84
        $region46: #{tpu_custom_call.1} parent=39 // pred_check_branch
          %295 = sbr.rel (%p293) target = $region48
        $region47: #{tpu_custom_call.1} parent=39 // pred_region
          %297 = dma.done [#allocation6], 256
        $region48: #{tpu_custom_call.1} parent=39 // pred_fallthru
          _
        // Predicated region
        $region49: #{tpu_custom_call.1} parent=39 // pred_check
          %p298 = pneg %p126
        $region50: #{tpu_custom_call.1} parent=39 // pred_check_branch
          %300 = sbr.rel (%p298) target = $region52
        $region51: #{tpu_custom_call.1} parent=39 // pred_region
          %302 = dma.done [#allocation6], 256
        $region52: #{tpu_custom_call.1} parent=39 // pred_fallthru
          _
        %s303 = sand.u32 %s50, 1
        %s304 = scalar_lea.sflag [#allocation3], %s303
        %s305 = sand.u32 %s50, 1
        %s306 = smul.addr %s305, 4
        %s307 = scalar_lea.vmem [#allocation2], %s306
        %p308 = pneg %p63
        %p309 = pneg %p60
        %p310 = pneg %p84
        %p311 = pneg %p81
        %p312 = pneg %p105
        %p313 = pneg %p102
        %p314 = pneg %p126
        %p315 = pneg %p123
        %p316 = pneg %p147
        %p317 = pneg %p144
        %p318 = pneg %p175
        %p319 = pneg %p172
        %s320 = sand.u32 %s162, 1
        %s321 = scalar_lea.sflag [#allocation4], %s320
        %s322 = sand.u32 %s162, 1
        %s323 = smul.addr %s322, 16
        %s324 = scalar_lea.vmem [#allocation8], %s323
        %p325 = pneg %p203
        %p326 = pneg %p200
        %s327 = sand.u32 %s190, 1
        %s328 = scalar_lea.sflag [#allocation10], %s327
        %s329 = sand.u32 %s190, 1
        %s330 = smul.addr %s329, 16
        %s331 = scalar_lea.vmem [#allocation9], %s330
        %v333 = vld [vmem:[%s287] sm:$0xf]
        %v334 = vld [vmem:[#allocation5] sm:$0xf]
        %v335 = vld [vmem:[#allocation5 + $0x4] sm:$0xf]
        %v336 = vld [vmem:[#allocation5 + $0x8] sm:$0xf]
        %v337 = vld [vmem:[#allocation5 + $0xc] sm:$0xf]
        %v338 = vld [vmem:[%s2] sm:$0x1]
        %v340 = vperm.slane %v338, 0
        %v346 = vunpack.c.l.b16 %v334
        %v347 = vunpack.c.l.b16 %v335
        %v348 = vunpack.c.l.b16 %v336
        %v349 = vunpack.c.l.b16 %v337
        %v350 = vpack.c.b16 %v347, %v346
        %v351 = vpack.c.b16 %v349, %v348
        %vm354 = vcmask 261120
        %v356 = vsel %vm354, %v333, 0
        %358 = vmatpush.bf16.msra.mxu0 0
        %359 = vmatpush.bf16.msra.mxu0 0
        %360 = vmatpush.bf16.msra.mxu0 0
        %361 = vmatpush.bf16.msra.mxu0 0
        %362 = vmatpush.bf16.msra.mxu0 0
        %363 = vmatpush.bf16.msra.mxu0 0
        %364 = vmatpush.bf16.msra.mxu0 %v351
        %365 = vmatpush.bf16.msra.mxu0 %v350
        %366 = vmatmul.bf16.gmra.mxu0 %v356
        %v367 = vpop.f32.mrf.mxu0
        %v368 = vadd.f32 %v340, %v367
        %v369 = vpop.f32.mrf.mxu0
        %370 = vdwg.mxu0
        %v371 = vld [vmem:[#allocation7] sm:$0xf]
        %v372 = vld [vmem:[#allocation7 + $0x4] sm:$0xf]
        %v373 = vld [vmem:[#allocation7 + $0x8] sm:$0xf]
        %v374 = vld [vmem:[#allocation7 + $0xc] sm:$0xf]
        %v375 = vld [vmem:[%s4] sm:$0x1]
        %v377 = vperm.slane %v375, 0
        %v383 = vunpack.c.l.b16 %v371
        %v384 = vunpack.c.l.b16 %v372
        %v385 = vunpack.c.l.b16 %v373
        %v386 = vunpack.c.l.b16 %v374
        %v387 = vpack.c.b16 %v384, %v383
        %v388 = vpack.c.b16 %v386, %v385
        %391 = vmatpush.bf16.msra.mxu0 0
        %392 = vmatpush.bf16.msra.mxu0 0
        %393 = vmatpush.bf16.msra.mxu0 0
        %394 = vmatpush.bf16.msra.mxu0 0
        %395 = vmatpush.bf16.msra.mxu0 0
        %396 = vmatpush.bf16.msra.mxu0 0
        %397 = vmatpush.bf16.msra.mxu0 %v388
        %398 = vmatpush.bf16.msra.mxu0 %v387
        %399 = vmatmul.bf16.gmra.mxu0 %v356
        %v400 = vpop.f32.mrf.mxu0
        %v401 = vadd.f32 %v377, %v400
        %v402 = vpop.f32.mrf.mxu0
        %403 = vdwg.mxu0
        %v404 = vpack.c.bf16 %v368, %v368
        %406 = vrot.lane.b32.xlu0 %v404, 120
        %v407 = vpop.permute.xlu0 %406
        %408 = vrot.lane.b32.xlu0 %v404, 112
        %v409 = vpop.permute.xlu0 %408
        %410 = vrot.lane.b32.xlu0 %v404, 104
        %v411 = vpop.permute.xlu0 %410
        %v414 = vpack.i.b16 %v407, %v404
        %v415 = vshrl.u32 %v404, 16
        %v416 = vshrl.u32 %v407, 16
        %v417 = vpack.i.b16 %v416, %v415
        %v420 = vpack.i.b16 %v411, %v409
        %v421 = vshrl.u32 %v409, 16
        %v422 = vshrl.u32 %v411, 16
        %v423 = vpack.i.b16 %v422, %v421
        %v426 = vunpack.c.l.s4 1983009808
        %v427 = vunpack.c.0.s8 %v426
        %v428 = vperm.slane %v414, %v427
        %v431 = vunpack.c.l.s4 1983009808
        %v432 = vunpack.c.0.s8 %v431
        %v433 = vperm.slane %v420, %v432
        %v434 = vrot.slane %v433, 4
        %vm435 = vcmask 1047556
        %v436 = vsel %vm435, %v434, %v428
        %v437 = vrot.slane %v428, 4
        %v438 = vsel %vm435, %v433, %v437
        %v440 = vunpack.c.l.s4 1934713408
        %v441 = vunpack.c.0.s8 %v440
        %v442 = vperm.slane %v436, %v441
        %v444 = vunpack.c.l.s4 1934713408
        %v445 = vunpack.c.0.s8 %v444
        %v446 = vperm.slane %v438, %v445
        %v447 = vrot.slane %v442, 4
        %v448 = vsel %vm435, 0, %v447
        %v449 = vrot.slane %v446, 4
        %v450 = vsel %vm435, 0, %v449
        %v453 = vunpack.c.l.s4 1983009808
        %v454 = vunpack.c.0.s8 %v453
        %v455 = vperm.slane %v417, %v454
        %v458 = vunpack.c.l.s4 1983009808
        %v459 = vunpack.c.0.s8 %v458
        %v460 = vperm.slane %v423, %v459
        %v461 = vrot.slane %v460, 4
        %v462 = vsel %vm435, %v461, %v455
        %v463 = vrot.slane %v455, 4
        %v464 = vsel %vm435, %v460, %v463
        %v466 = vunpack.c.l.s4 1934713408
        %v467 = vunpack.c.0.s8 %v466
        %v468 = vperm.slane %v462, %v467
        %v470 = vunpack.c.l.s4 1934713408
        %v471 = vunpack.c.0.s8 %v470
        %v472 = vperm.slane %v464, %v471
        %v473 = vrot.slane %v468, 4
        %v474 = vsel %vm435, 0, %v473
        %v475 = vrot.slane %v472, 4
        %v476 = vsel %vm435, 0, %v475
        %v477 = vsel %vm435, %v449, %v442
        %v479 = vunpack.c.l.s4 1983009808
        %v480 = vunpack.c.0.s8 %v479
        %v481 = vperm.slane %v477, %v480
        %v482 = vrot.slane %v450, 4
        %v483 = vsel %vm435, %v482, %v448
        %v485 = vunpack.c.l.s4 1983009808
        %v486 = vunpack.c.0.s8 %v485
        %v487 = vperm.slane %v483, %v486
        %v488 = vrot.slane %v487, 4
        %v489 = vsel %vm435, %v488, %v481
        %v491 = vunpack.c.l.s4 1934713408
        %v492 = vunpack.c.0.s8 %v491
        %v493 = vperm.slane %v489, %v492
        %v494 = vrot.slane %v493, 4
        %v495 = vsel %vm435, 0, %v494
        %v496 = vsel %vm435, %v475, %v468
        %v498 = vunpack.c.l.s4 1983009808
        %v499 = vunpack.c.0.s8 %v498
        %v500 = vperm.slane %v496, %v499
        %v501 = vrot.slane %v476, 4
        %v502 = vsel %vm435, %v501, %v474
        %v504 = vunpack.c.l.s4 1983009808
        %v505 = vunpack.c.0.s8 %v504
        %v506 = vperm.slane %v502, %v505
        %v507 = vrot.slane %v506, 4
        %v508 = vsel %vm435, %v507, %v500
        %v510 = vunpack.c.l.s4 1934713408
        %v511 = vunpack.c.0.s8 %v510
        %v512 = vperm.slane %v508, %v511
        %v513 = vrot.slane %v512, 4
        %v514 = vsel %vm435, 0, %v513
        %v517 = vpack.i.b16 %v512, %v493
        %v519 = vshrl.u32 %v493, 16
        %v520 = vshrl.u32 %v512, 16
        %v521 = vpack.i.b16 %v520, %v519
        %v525 = vpack.i.b16 %v514, %v495
        %v527 = vshrl.u32 %v495, 16
        %v528 = vshrl.u32 %v514, 16
        %v529 = vpack.i.b16 %v528, %v527
        %vm531 = vcmask 60416
        %532 = vst.msk [vmem:[%s324] sm:$0xf] %vm531, %v517
        %533 = vst.msk [vmem:[%s324 + $0x4] sm:$0xf] %vm531, %v521
        %534 = vst.msk [vmem:[%s324 + $0x8] sm:$0xf] %vm531, %v525
        %535 = vst.msk [vmem:[%s324 + $0xc] sm:$0xf] %vm531, %v529
        %v536 = vpack.c.bf16 %v401, %v401
        %538 = vrot.lane.b32.xlu0 %v536, 120
        %v539 = vpop.permute.xlu0 %538
        %540 = vrot.lane.b32.xlu0 %v536, 112
        %v541 = vpop.permute.xlu0 %540
        %542 = vrot.lane.b32.xlu0 %v536, 104
        %v543 = vpop.permute.xlu0 %542
        %v546 = vpack.i.b16 %v539, %v536
        %v547 = vshrl.u32 %v536, 16
        %v548 = vshrl.u32 %v539, 16
        %v549 = vpack.i.b16 %v548, %v547
        %v552 = vpack.i.b16 %v543, %v541
        %v553 = vshrl.u32 %v541, 16
        %v554 = vshrl.u32 %v543, 16
        %v555 = vpack.i.b16 %v554, %v553
        %v558 = vunpack.c.l.s4 1983009808
        %v559 = vunpack.c.0.s8 %v558
        %v560 = vperm.slane %v546, %v559
        %v563 = vunpack.c.l.s4 1983009808
        %v564 = vunpack.c.0.s8 %v563
        %v565 = vperm.slane %v552, %v564
        %v566 = vrot.slane %v565, 4
        %v567 = vsel %vm435, %v566, %v560
        %v568 = vrot.slane %v560, 4
        %v569 = vsel %vm435, %v565, %v568
        %v571 = vunpack.c.l.s4 1934713408
        %v572 = vunpack.c.0.s8 %v571
        %v573 = vperm.slane %v567, %v572
        %v575 = vunpack.c.l.s4 1934713408
        %v576 = vunpack.c.0.s8 %v575
        %v577 = vperm.slane %v569, %v576
        %v578 = vrot.slane %v573, 4
        %v579 = vsel %vm435, 0, %v578
        %v580 = vrot.slane %v577, 4
        %v581 = vsel %vm435, 0, %v580
        %v584 = vunpack.c.l.s4 1983009808
        %v585 = vunpack.c.0.s8 %v584
        %v586 = vperm.slane %v549, %v585
        %v589 = vunpack.c.l.s4 1983009808
        %v590 = vunpack.c.0.s8 %v589
        %v591 = vperm.slane %v555, %v590
        %v592 = vrot.slane %v591, 4
        %v593 = vsel %vm435, %v592, %v586
        %v594 = vrot.slane %v586, 4
        %v595 = vsel %vm435, %v591, %v594
        %v597 = vunpack.c.l.s4 1934713408
        %v598 = vunpack.c.0.s8 %v597
        %v599 = vperm.slane %v593, %v598
        %v601 = vunpack.c.l.s4 1934713408
        %v602 = vunpack.c.0.s8 %v601
        %v603 = vperm.slane %v595, %v602
        %v604 = vrot.slane %v599, 4
        %v605 = vsel %vm435, 0, %v604
        %v606 = vrot.slane %v603, 4
        %v607 = vsel %vm435, 0, %v606
        %v608 = vsel %vm435, %v580, %v573
        %v610 = vunpack.c.l.s4 1983009808
        %v611 = vunpack.c.0.s8 %v610
        %v612 = vperm.slane %v608, %v611
        %v613 = vrot.slane %v581, 4
        %v614 = vsel %vm435, %v613, %v579
        %v616 = vunpack.c.l.s4 1983009808
        %v617 = vunpack.c.0.s8 %v616
        %v618 = vperm.slane %v614, %v617
        %v619 = vrot.slane %v618, 4
        %v620 = vsel %vm435, %v619, %v612
        %v622 = vunpack.c.l.s4 1934713408
        %v623 = vunpack.c.0.s8 %v622
        %v624 = vperm.slane %v620, %v623
        %v625 = vrot.slane %v624, 4
        %v626 = vsel %vm435, 0, %v625
        %v627 = vsel %vm435, %v606, %v599
        %v629 = vunpack.c.l.s4 1983009808
        %v630 = vunpack.c.0.s8 %v629
        %v631 = vperm.slane %v627, %v630
        %v632 = vrot.slane %v607, 4
        %v633 = vsel %vm435, %v632, %v605
        %v635 = vunpack.c.l.s4 1983009808
        %v636 = vunpack.c.0.s8 %v635
        %v637 = vperm.slane %v633, %v636
        %v638 = vrot.slane %v637, 4
        %v639 = vsel %vm435, %v638, %v631
        %v641 = vunpack.c.l.s4 1934713408
        %v642 = vunpack.c.0.s8 %v641
        %v643 = vperm.slane %v639, %v642
        %v644 = vrot.slane %v643, 4
        %v645 = vsel %vm435, 0, %v644
        %v648 = vpack.i.b16 %v643, %v624
        %v650 = vshrl.u32 %v624, 16
        %v651 = vshrl.u32 %v643, 16
        %v652 = vpack.i.b16 %v651, %v650
        %v656 = vpack.i.b16 %v645, %v626
        %v658 = vshrl.u32 %v626, 16
        %v659 = vshrl.u32 %v645, 16
        %v660 = vpack.i.b16 %v659, %v658
        %662 = vst.msk [vmem:[%s331] sm:$0xf] %vm531, %v648
        %663 = vst.msk [vmem:[%s331 + $0x4] sm:$0xf] %vm531, %v652
        %664 = vst.msk [vmem:[%s331 + $0x8] sm:$0xf] %vm531, %v656
        %665 = vst.msk [vmem:[%s331 + $0xc] sm:$0xf] %vm531, %v660
        %s666 = sand.u32 %s162, 1
        %s667 = scalar_lea.sflag [#allocation4], %s666
        %s668 = sand.u32 %s162, 1
        %s669 = smul.addr %s668, 16
        %s670 = scalar_lea.vmem [#allocation8], %s669
        %s671 = sand.u32 %s190, 1
        %s672 = scalar_lea.sflag [#allocation10], %s671
        %s673 = sand.u32 %s190, 1
        %s674 = smul.addr %s673, 16
        %s675 = scalar_lea.vmem [#allocation9], %s674
        // Predicated region
        $region53: #{tpu_custom_call.1} parent=39 // pred_check
          %p676 = pneg %p172
        $region54: #{tpu_custom_call.1} parent=39 // pred_check_branch
          %678 = sbr.rel (%p676) target = $region56
        $region55: #{tpu_custom_call.1} parent=39 // pred_region
          %680 = vsyncadd %s667, 0
          %s681 = smul.addr %s32, 4
          %s682 = sadd.s32 %s33, %s681
          %s683 = smul.addr %s682, 4
          %s684 = scalar_lea.hbm %s5, %s683
          %s685 = sshll.u32 %s670, 4
          %s686 = int_to_ptr.vmem [resolvable:$true] %s685
          %s687 = sshll.u32 %s684, 4
          %s688 = int_to_ptr.hbm [resolvable:$true] %s687
          %693 = dma.vmem_to_hbm [thread:$0]  %s686, 256, %s688, %s667, 64, 64, 4
        $region56: #{tpu_custom_call.1} parent=39 // pred_fallthru
          _
        // Predicated region
        $region57: #{tpu_custom_call.1} parent=39 // pred_check
          %p694 = pneg %p200
        $region58: #{tpu_custom_call.1} parent=39 // pred_check_branch
          %696 = sbr.rel (%p694) target = $region60
        $region59: #{tpu_custom_call.1} parent=39 // pred_region
          %698 = vsyncadd %s672, 0
          %s699 = smul.addr %s32, 4
          %s700 = sadd.s32 %s33, %s699
          %s701 = smul.addr %s700, 4
          %s702 = scalar_lea.hbm %s6, %s701
          %s703 = sshll.u32 %s675, 4
          %s704 = int_to_ptr.vmem [resolvable:$true] %s703
          %s705 = sshll.u32 %s702, 4
          %s706 = int_to_ptr.hbm [resolvable:$true] %s705
          %711 = dma.vmem_to_hbm [thread:$0]  %s704, 256, %s706, %s672, 64, 64, 4
        $region60: #{tpu_custom_call.1} parent=39 // pred_fallthru
          _
      $region40: #{tpu_custom_call.1} parent=5 // pred_fallthru
        _
      %p712 = scmp.le.s32.totalorder 2, %s23
      // Predicated region
      $region61: #{tpu_custom_call.1} parent=5 // pred_check
        %p713 = pneg %p712
      $region62: #{tpu_custom_call.1} parent=5 // pred_check_branch
        %715 = sbr.rel (%p713) target = $region64
      $region63: #{tpu_custom_call.1} parent=5 // pred_region
        %s716 = ssub.s32 %s23, 2
        // Predicated region
        $region65: #{tpu_custom_call.1} parent=63 // pred_check
          %p717 = pneg %p178
        $region66: #{tpu_custom_call.1} parent=63 // pred_check_branch
          %719 = sbr.rel (%p717) target = $region68
        $region67: #{tpu_custom_call.1} parent=63 // pred_region
          %s720 = sand.u32 %s163, 1
          %s721 = scalar_lea.sflag [#allocation4], %s720
          %s722 = sand.u32 %s163, 1
          %s723 = smul.addr %s722, 16
          %s724 = scalar_lea.vmem [#allocation8], %s723
          %726 = dma.done %s721, 256
        $region68: #{tpu_custom_call.1} parent=63 // pred_fallthru
          _
        // Predicated region
        $region69: #{tpu_custom_call.1} parent=63 // pred_check
          %p727 = pneg %p206
        $region70: #{tpu_custom_call.1} parent=63 // pred_check_branch
          %729 = sbr.rel (%p727) target = $region72
        $region71: #{tpu_custom_call.1} parent=63 // pred_region
          %s730 = sand.u32 %s191, 1
          %s731 = scalar_lea.sflag [#allocation10], %s730
          %s732 = sand.u32 %s191, 1
          %s733 = smul.addr %s732, 16
          %s734 = scalar_lea.vmem [#allocation9], %s733
          %736 = dma.done %s731, 256
        $region72: #{tpu_custom_call.1} parent=63 // pred_fallthru
          _
      $region64: #{tpu_custom_call.1} parent=5 // pred_fallthru
        _
    $region6: #{tpu_custom_call.1} parent=1 // loop_footer
      %s27 = sadd.s32 1, %s23
    $region7: #{tpu_custom_call.1} parent=1 // loop_footer_branch
      %22 = sbr.rel target = $region3
    $region8: #{tpu_custom_call.1} parent=1 // loop_exit
      _
    %737 = vsyncpa [#allocation3], 1
    %s738 = scalar_lea.sflag [#allocation3], 1
    %739 = vsyncpa %s738, 1
    %740 = vsyncpa [#allocation6], 1
    %741 = vsyncpa [#allocation4], 1
    %s742 = scalar_lea.sflag [#allocation4], 1
    %743 = vsyncpa %s742, 1
    %744 = vsyncpa [#allocation10], 1
    %s745 = scalar_lea.sflag [#allocation10], 1
    %746 = vsyncpa %s745, 1

</llo_original>
